<compile_context>
chip_gen: v6e
topology: v6e:2x2x1
jax: 0.10.0
libtpu: 0.0.40
codegen_flags: <defaults>
</compile_context>

<pallas_src>
import functools

import jax
import jax.numpy as jnp
from jax import lax
from jax.experimental import pallas as pl
from jax.experimental.pallas import tpu as pltpu


def _round_up(x, m):
    return ((x + m - 1) // m) * m


def _lca_threshold(u, sparse_mult, thresh_type="soft", rectify=True):
    """lca_threshold from DeepSparseCoding (soft/hard, rectified or not)."""
    zeros = jnp.zeros_like(u)
    if thresh_type == "soft":
        if rectify:
            return jnp.where(u > sparse_mult, u - sparse_mult, zeros)
        return jnp.where(
            u >= sparse_mult, u - sparse_mult,
            jnp.where(u <= -sparse_mult, u + sparse_mult, zeros))
    else:  # hard
        if rectify:
            return jnp.where(u > sparse_mult, u, zeros)
        return jnp.where(
            u >= sparse_mult, u,
            jnp.where(u <= -sparse_mult, u, zeros))


def _gram_kernel(w_ref, g_ref, acc_ref):
    """gram = w.T @ w, reduced over the pixel axis across the grid."""
    @pl.when(pl.program_id(0) == 0)
    def _():
        acc_ref[...] = jnp.zeros_like(acc_ref)

    w = w_ref[...]
    acc_ref[...] += lax.dot_general(
        w, w,
        dimension_numbers=(((0,), (0,)), ((), ())),
        preferred_element_type=jnp.float32,
        precision=lax.Precision.HIGHEST,
    )

    @pl.when(pl.program_id(0) == pl.num_programs(0) - 1)
    def _():
        g_ref[...] = acc_ref[...]


def _lca_kernel(x_ref, w_ref, wt_ref, gram_ref, recon_ref, *, num_steps,
                step_size, sparse_mult, thresh_type, rectify, use_bf16,
                split_batch):
    w = w_ref[...]          # [P, L] f32
    wt = wt_ref[...]        # [L, P] f32 (precomputed transpose)
    gram = gram_ref[...]    # [L, L] f32 (= w.T @ w; identity folded below)

    hi = lax.Precision.HIGHEST
    if use_bf16:
        gram_mm = gram.astype(jnp.bfloat16)   # hoisted: cast once, reused
        loop_prec = None                      # single-pass bf16 MXU
    else:
        gram_mm = gram
        loop_prec = lax.Precision.HIGH        # 3-pass, ~f32 accuracy

    s = step_size
    keep = 1.0 - step_size

    def thresh(u):
        return _lca_threshold(u, sparse_mult, thresh_type, rectify)

    def init_chain(x):
        # One-time excitatory current b = x @ w at full precision.
        b = jnp.dot(x, w, preferred_element_type=jnp.float32, precision=hi)
        return s * b, jnp.zeros(b.shape, jnp.float32)

    def step(u, b_s):
        # With g = gram - I:
        #   du = b - a@g - u = b - a@gram + a - u
        #   u' = u + s*du   = (1-s)*u + s*(a - a@gram) + s*b
        a = thresh(u)
        a_mm = a.astype(jnp.bfloat16) if use_bf16 else a
        ea = jnp.dot(a_mm, gram_mm, preferred_element_type=jnp.float32,
                     precision=loop_prec)
        return keep * u + s * (a - ea) + b_s

    def recon_of(a):
        # recon = a @ w.T via standard (1,0) contraction against wt.
        return jnp.dot(a, wt, preferred_element_type=jnp.float32,
                       precision=hi).astype(recon_ref.dtype)

    if split_batch:
        half = x_ref.shape[0] // 2
        b_s0, u0 = init_chain(x_ref[pl.ds(0, half), :])
        b_s1, u1 = init_chain(x_ref[pl.ds(half, half), :])

        def body(_, carry):
            ua, ub = carry
            # Two independent half-batches: the VPU threshold/axpy of one half
            # overlaps the MXU a@gram of the other.
            return step(ua, b_s0), step(ub, b_s1)

        u0, u1 = lax.fori_loop(0, num_steps - 1, body, (u0, u1), unroll=2)
        recon_ref[pl.ds(0, half), :] = recon_of(thresh(u0))
        recon_ref[pl.ds(half, half), :] = recon_of(thresh(u1))
    else:
        b_s, u = init_chain(x_ref[...])
        u = lax.fori_loop(0, num_steps - 1, lambda _, uu: step(uu, b_s), u,
                          unroll=2)
        recon_ref[...] = recon_of(thresh(u))


def _pick_k_tile(p):
    for t in (512, 256, 128):
        if p % t == 0:
            return t
    return p


def lca_forward(x, w, *, num_steps=20, step_size=0.1, sparse_mult=0.2,
                thresh_type="soft", rectify=True, use_bf16=True,
                batch_tile=256):
    """Run LcaModule.forward as Pallas TPU kernels.

    x: [batch, num_pixels] f32, w: [num_pixels, num_latent] f32.
    Returns reconstruction [batch, num_pixels] f32.
    """
    batch, num_pixels = x.shape
    _, num_latent = w.shape

    # --- Gram matrix once, reduced over pixels (VMEM-bounded for large P). --
    tk = _pick_k_tile(num_pixels)
    gram = pl.pallas_call(
        _gram_kernel,
        out_shape=jax.ShapeDtypeStruct((num_latent, num_latent), jnp.float32),
        grid=(num_pixels // tk,),
        in_specs=[pl.BlockSpec((tk, num_latent), lambda k: (k, 0))],
        out_specs=pl.BlockSpec((num_latent, num_latent), lambda k: (0, 0)),
        scratch_shapes=[pltpu.VMEM((num_latent, num_latent), jnp.float32)],
        compiler_params=pltpu.CompilerParams(
            dimension_semantics=("arbitrary",)),
    )(w)

    # --- Precompute w.T once (one-time XLA transpose, not per batch tile). --
    wt = jnp.transpose(w)

    # --- Batch tile: as large as reasonable, but keep >= 2 grid tiles when
    #     possible so both v7x TensorCores get work via "parallel". ----------
    batch_tile = max(8, _round_up(int(batch_tile), 8))
    b8 = _round_up(batch, 8)
    tb = min(batch_tile, b8)
    if b8 >= 16:
        tb = min(tb, _round_up((b8 + 1) // 2, 8))
    padded = _round_up(batch, tb)
    if padded != batch:
        # Padded rows are zero -> b = 0 -> u/a stay 0 -> recon = 0; sliced off.
        x = jnp.pad(x, ((0, padded - batch), (0, 0)))

    split_batch = (tb >= 16) and (tb % 16 == 0)

    kernel = functools.partial(
        _lca_kernel,
        num_steps=int(num_steps),
        step_size=float(step_size),       # plain Python floats: baked-in
        sparse_mult=float(sparse_mult),   # constants inside the kernel
        thresh_type=thresh_type,
        rectify=rectify,
        use_bf16=use_bf16,
        split_batch=split_batch,
    )

    recon = pl.pallas_call(
        kernel,
        out_shape=jax.ShapeDtypeStruct((padded, num_pixels), jnp.float32),
        grid=(padded // tb,),
        in_specs=[
            pl.BlockSpec((tb, num_pixels), lambda i: (i, 0)),
            pl.BlockSpec((num_pixels, num_latent), lambda i: (0, 0)),
            pl.BlockSpec((num_latent, num_pixels), lambda i: (0, 0)),
            pl.BlockSpec((num_latent, num_latent), lambda i: (0, 0)),
        ],
        out_specs=pl.BlockSpec((tb, num_pixels), lambda i: (i, 0)),
        compiler_params=pltpu.CompilerParams(
            dimension_semantics=("parallel",)),
    )(x, w, wt, gram)

    return recon[:batch]


def lca_forward_ref(x, w, *, num_steps=20, step_size=0.1, sparse_mult=0.2,
                    thresh_type="soft", rectify=True):
    """Pure-JAX reference for correctness checking (true-f32 matmuls)."""
    hi = lax.Precision.HIGHEST
    b = jnp.dot(x, w, precision=hi)
    g = jnp.dot(w.T, w, precision=hi) - jnp.eye(w.shape[1], dtype=jnp.float32)
    u = jnp.zeros((x.shape[0], w.shape[1]), jnp.float32)
    a = _lca_threshold(u, sparse_mult, thresh_type, rectify)
    for _ in range(num_steps - 1):
        u = u + step_size * (b - jnp.dot(a, g, precision=hi) - u)
        a = _lca_threshold(u, sparse_mult, thresh_type, rectify)
    return jnp.dot(a, w.T, precision=hi)


if __name__ == "__main__":
    # Small, TPU-friendly shapes consistent with the module's matmul structure
    # (dense [B, P] @ [P, L]); batch chosen so the grid has >1 tile.
    batch = 256
    num_pixels = 256
    num_latent = 128

    key = jax.random.PRNGKey(0)
    kx, kw = jax.random.split(key)

    # w = randn(P, L) with columns L2-normalized (dim=0), matching
    # F.normalize(torch.randn(P, L), p=2, dim=0).
    w_raw = jax.random.normal(kw, (num_pixels, num_latent), dtype=jnp.float32)
    w = w_raw / jnp.linalg.norm(w_raw, axis=0, keepdims=True)

    x = jax.random.normal(kx, (batch, num_pixels), dtype=jnp.float32)

    ref = lca_forward_ref(x, w, num_steps=20, step_size=0.1, sparse_mult=0.2)

    # f32-state / Precision.HIGH-loop path: close match to the f32 reference.
    out_f32 = jax.block_until_ready(
        lca_forward(x, w, num_steps=20, step_size=0.1, sparse_mult=0.2,
                    use_bf16=False))
    assert out_f32.shape == (batch, num_pixels)
    assert jnp.allclose(out_f32, ref, atol=2e-3, rtol=2e-3), \
        "f32/HIGH path mismatch vs reference"

    # Default path: bf16 loop-matmul operands (f32 state + f32 accumulation).
    out_bf16 = jax.block_until_ready(
        lca_forward(x, w, num_steps=20, step_size=0.1, sparse_mult=0.2))
    assert out_bf16.shape == (batch, num_pixels)
    rel = float(jnp.linalg.norm(out_bf16 - ref) /
                (jnp.linalg.norm(ref) + 1e-6))
    assert rel < 5e-2, f"bf16 relative error too large: {rel}"

    print("KERNEL_OK")
</pallas_src>

<mosaic_0001>
module attributes {stable_mosaic.version = 11 : i64} {
  func.func @_gram_kernel(%arg0: i32, %arg1: memref<256x128xf32, #tpu.memory_space<vmem>>, %arg2: memref<128x128xf32, #tpu.memory_space<vmem>>, %arg3: memref<128x128xf32, #tpu.memory_space<vmem>>) attributes {dimension_semantics = [#tpu.dimension_semantics<arbitrary>], iteration_bounds = array<i64: 1>, scalar_prefetch = 0 : i64, scratch_operands = 1 : i64, tpu.core_type = #tpu.core_type<tc>, window_params = [{transform_indices = @transform_0, window_bounds = array<i64: 256, 128>}, {pipeline_mode = #tpu.pipeline_mode<synchronous>, transform_indices = @transform_1, window_bounds = array<i64: 128, 128>}]} {
    %c0_i32 = arith.constant 0 : i32
    %0 = arith.cmpi eq, %arg0, %c0_i32 : i32
    %1 = arith.extui %0 : i1 to i32
    %c0_i32_0 = arith.constant 0 : i32
    %2 = arith.cmpi ne, %1, %c0_i32_0 : i32
    scf.if %2 {
      %cst_8 = arith.constant 0.000000e+00 : f32
      %11 = vector.broadcast %cst_8 : f32 to vector<128x128xf32>
      %c0_9 = arith.constant 0 : index
      %c0_10 = arith.constant 0 : index
      %12 = vector.load %arg3[%c0_9, %c0_10] : memref<128x128xf32, #tpu.memory_space<vmem>>, vector<128x128xf32>
      tpu.vector_store %arg3[%c0_9, %c0_10], %11 {strides = array<i32>} : memref<128x128xf32, #tpu.memory_space<vmem>>, vector<128x128xf32>,
    } else {
    }
    %c0 = arith.constant 0 : index
    %c0_1 = arith.constant 0 : index
    %3 = vector.load %arg1[%c0, %c0_1] : memref<256x128xf32, #tpu.memory_space<vmem>>, vector<256x128xf32>
    %c0_2 = arith.constant 0 : index
    %c0_3 = arith.constant 0 : index
    %4 = vector.load %arg3[%c0_2, %c0_3] : memref<128x128xf32, #tpu.memory_space<vmem>>, vector<128x128xf32>
    %cst = arith.constant dense<0.000000e+00> : vector<128x128xf32>
    %5 = tpu.matmul %3, %3, %cst {dimension_numbers = #tpu.dot_dimension_numbers<[0], [0], [1], [1], [0, 1, 1, 1], [], []>, precision = #tpu.contract_precision<fp32>} : vector<256x128xf32>, vector<256x128xf32>, vector<128x128xf32> -> vector<128x128xf32>
    %6 = arith.addf %4, %5 : vector<128x128xf32>
    %c0_4 = arith.constant 0 : index
    %c0_5 = arith.constant 0 : index
    %7 = vector.load %arg3[%c0_4, %c0_5] : memref<128x128xf32, #tpu.memory_space<vmem>>, vector<128x128xf32>
    tpu.vector_store %arg3[%c0_4, %c0_5], %6 {strides = array<i32>} : memref<128x128xf32, #tpu.memory_space<vmem>>, vector<128x128xf32>,
    %c0_i32_6 = arith.constant 0 : i32
    %8 = arith.cmpi eq, %arg0, %c0_i32_6 : i32
    %9 = arith.extui %8 : i1 to i32
    %c0_i32_7 = arith.constant 0 : i32
    %10 = arith.cmpi ne, %9, %c0_i32_7 : i32
    scf.if %10 {
      %c0_8 = arith.constant 0 : index
      %c0_9 = arith.constant 0 : index
      %11 = vector.load %arg3[%c0_8, %c0_9] : memref<128x128xf32, #tpu.memory_space<vmem>>, vector<128x128xf32>
      %c0_10 = arith.constant 0 : index
      %c0_11 = arith.constant 0 : index
      %12 = vector.load %arg2[%c0_10, %c0_11] : memref<128x128xf32, #tpu.memory_space<vmem>>, vector<128x128xf32>
      tpu.vector_store %arg2[%c0_10, %c0_11], %11 {strides = array<i32>} : memref<128x128xf32, #tpu.memory_space<vmem>>, vector<128x128xf32>,
    } else {
    }
    return
  }
  func.func @transform_0(%arg0: i32) -> (i32, i32) {
    %c0_i32 = arith.constant 0 : i32
    %c0_i32_0 = arith.constant 0 : i32
    return %arg0, %c0_i32 : i32, i32
  }
  func.func @transform_1(%arg0: i32) -> (i32, i32) {
    %c0_i32 = arith.constant 0 : i32
    %c0_i32_0 = arith.constant 0 : i32
    %c0_i32_1 = arith.constant 0 : i32
    return %c0_i32, %c0_i32_0 : i32, i32
  }
}

</mosaic_0001>

<llo_original>
// kernel: tpu_custom_call.1
$region0: #{tpu_custom_call.1}
  #allocation0 [shape = 'u32[]', space=smem, size = 0x4, offset = 0x4, fixed_abs, tag = 'smem constant byte address 0x4 - core index']
  #allocation1 [shape = 'u32[144,128]{1,0:T(1,128)}', space=vmem, size = 0x12000, scoped, tag = 'internal scratch']
  #allocation2 [shape = 'f32[128,128]{1,0:T(8,128)}', space=vmem, size = 0x10000, scoped, tag = 'scratch operand']
  %s0 = inlined_call_operand.hbm [shape: f32[256,128], index: 0, kind: input, shape index: {}]
  %s1 = inlined_call_operand.hbm [shape: f32[128,128], index: 1, kind: output, shape index: {}]
  %s2 = sld [smem:[#allocation0]]
  $region26: #{tpu_custom_call.1} parent=0
    _
  %s4 = ssub.s32 1, %s2
  %s5 = scalar_select 0, %s4, %s2
  $region1: #{tpu_custom_call.1} parent=0
    #allocation3 [shape = 'u8[131072]{0}', space=vmem, size = 0x20000, scoped, tag = 'input window, operand 0, single buffered']
    #allocation4 [shape = 's32[1]{0}', space=sflag, size = 0x4, scoped, tag = 'scoped memory for tpu_custom_call.1']
    #allocation5 [shape = 's32[1]{0}', space=sflag, size = 0x4, scoped, tag = 'scoped memory for tpu_custom_call.1']
    #allocation6 [shape = 'u8[65536]{0}', space=vmem, size = 0x10000, scoped, tag = 'output window, operand 0, single buffered']
    %6 = vsyncpa [#allocation4], 0
    %7 = vsyncpa [#allocation5], 0
    // Predicated region
    $region2: #{tpu_custom_call.1} parent=1 // pred_check
      _
    $region3: #{tpu_custom_call.1} parent=1 // pred_check_branch
      %9 = sbr.rel (0) target = $region5
    $region4: #{tpu_custom_call.1} parent=1 // pred_region
      %s11 = ssub.s32 4096, 4096
      %12 = vsyncadd [#allocation4], %s11
      %s13 = sshll.u32 [#allocation3], 4
      %s14 = int_to_ptr.vmem [resolvable:$true] %s13
      %19 = dma.hbm_to_vmem [thread:$0]  %s0, 4096, %s14, [#allocation4], 128, 128, 8
    $region5: #{tpu_custom_call.1} parent=1 // pred_fallthru
      _
    // Predicated region
    $region6: #{tpu_custom_call.1} parent=1 // pred_check
      _
    $region7: #{tpu_custom_call.1} parent=1 // pred_check_branch
      %21 = sbr.rel (0) target = $region9
    $region8: #{tpu_custom_call.1} parent=1 // pred_region
      %22 = dma.done [#allocation4], 4096
    $region9: #{tpu_custom_call.1} parent=1 // pred_fallthru
      _
    %p23 = scmp.eq.s32.totalorder 0, 0
    // Predicated region
    $region10: #{tpu_custom_call.1} parent=1 // pred_check
      %p24 = pneg %p23
    $region11: #{tpu_custom_call.1} parent=1 // pred_check_branch
      %26 = sbr.rel (%p24) target = $region13
    $region12: #{tpu_custom_call.1} parent=1 // pred_region
      %27 = vst [vmem:[#allocation2] sm:$0xff] 0.0
      %28 = vst [vmem:[#allocation2 + $0x8] sm:$0xff] 0.0
      %29 = vst [vmem:[#allocation2 + $0x10] sm:$0xff] 0.0
      %30 = vst [vmem:[#allocation2 + $0x18] sm:$0xff] 0.0
      %31 = vst [vmem:[#allocation2 + $0x20] sm:$0xff] 0.0
      %32 = vst [vmem:[#allocation2 + $0x28] sm:$0xff] 0.0
      %33 = vst [vmem:[#allocation2 + $0x30] sm:$0xff] 0.0
      %34 = vst [vmem:[#allocation2 + $0x38] sm:$0xff] 0.0
      %35 = vst [vmem:[#allocation2 + $0x40] sm:$0xff] 0.0
      %36 = vst [vmem:[#allocation2 + $0x48] sm:$0xff] 0.0
      %37 = vst [vmem:[#allocation2 + $0x50] sm:$0xff] 0.0
      %38 = vst [vmem:[#allocation2 + $0x58] sm:$0xff] 0.0
      %39 = vst [vmem:[#allocation2 + $0x60] sm:$0xff] 0.0
      %40 = vst [vmem:[#allocation2 + $0x68] sm:$0xff] 0.0
      %41 = vst [vmem:[#allocation2 + $0x70] sm:$0xff] 0.0
      %42 = vst [vmem:[#allocation2 + $0x78] sm:$0xff] 0.0
    $region13: #{tpu_custom_call.1} parent=1 // pred_fallthru
      _
    %v43 = vld [vmem:[#allocation3] sm:$0xff]
    %v44 = vld [vmem:[#allocation3 + $0x8] sm:$0xff]
    %v45 = vld [vmem:[#allocation3 + $0x10] sm:$0xff]
    %v46 = vld [vmem:[#allocation3 + $0x18] sm:$0xff]
    %v47 = vld [vmem:[#allocation3 + $0x20] sm:$0xff]
    %v48 = vld [vmem:[#allocation3 + $0x28] sm:$0xff]
    %v49 = vld [vmem:[#allocation3 + $0x30] sm:$0xff]
    %v50 = vld [vmem:[#allocation3 + $0x38] sm:$0xff]
    %v51 = vld [vmem:[#allocation3 + $0x40] sm:$0xff]
    %v52 = vld [vmem:[#allocation3 + $0x48] sm:$0xff]
    %v53 = vld [vmem:[#allocation3 + $0x50] sm:$0xff]
    %v54 = vld [vmem:[#allocation3 + $0x58] sm:$0xff]
    %v55 = vld [vmem:[#allocation3 + $0x60] sm:$0xff]
    %v56 = vld [vmem:[#allocation3 + $0x68] sm:$0xff]
    %v57 = vld [vmem:[#allocation3 + $0x70] sm:$0xff]
    %v58 = vld [vmem:[#allocation3 + $0x78] sm:$0xff]
    %v59 = vld [vmem:[#allocation3 + $0x80] sm:$0xff]
    %v60 = vld [vmem:[#allocation3 + $0x88] sm:$0xff]
    %v61 = vld [vmem:[#allocation3 + $0x90] sm:$0xff]
    %v62 = vld [vmem:[#allocation3 + $0x98] sm:$0xff]
    %v63 = vld [vmem:[#allocation3 + $0xa0] sm:$0xff]
    %v64 = vld [vmem:[#allocation3 + $0xa8] sm:$0xff]
    %v65 = vld [vmem:[#allocation3 + $0xb0] sm:$0xff]
    %v66 = vld [vmem:[#allocation3 + $0xb8] sm:$0xff]
    %v67 = vld [vmem:[#allocation3 + $0xc0] sm:$0xff]
    %v68 = vld [vmem:[#allocation3 + $0xc8] sm:$0xff]
    %v69 = vld [vmem:[#allocation3 + $0xd0] sm:$0xff]
    %v70 = vld [vmem:[#allocation3 + $0xd8] sm:$0xff]
    %v71 = vld [vmem:[#allocation3 + $0xe0] sm:$0xff]
    %v72 = vld [vmem:[#allocation3 + $0xe8] sm:$0xff]
    %v73 = vld [vmem:[#allocation3 + $0xf0] sm:$0xff]
    %v74 = vld [vmem:[#allocation3 + $0xf8] sm:$0xff]
    %v75 = vld [vmem:[#allocation2] sm:$0xff]
    %v76 = vld [vmem:[#allocation2 + $0x8] sm:$0xff]
    %v77 = vld [vmem:[#allocation2 + $0x10] sm:$0xff]
    %v78 = vld [vmem:[#allocation2 + $0x18] sm:$0xff]
    %v79 = vld [vmem:[#allocation2 + $0x20] sm:$0xff]
    %v80 = vld [vmem:[#allocation2 + $0x28] sm:$0xff]
    %v81 = vld [vmem:[#allocation2 + $0x30] sm:$0xff]
    %v82 = vld [vmem:[#allocation2 + $0x38] sm:$0xff]
    %v83 = vld [vmem:[#allocation2 + $0x40] sm:$0xff]
    %v84 = vld [vmem:[#allocation2 + $0x48] sm:$0xff]
    %v85 = vld [vmem:[#allocation2 + $0x50] sm:$0xff]
    %v86 = vld [vmem:[#allocation2 + $0x58] sm:$0xff]
    %v87 = vld [vmem:[#allocation2 + $0x60] sm:$0xff]
    %v88 = vld [vmem:[#allocation2 + $0x68] sm:$0xff]
    %v89 = vld [vmem:[#allocation2 + $0x70] sm:$0xff]
    %v90 = vld [vmem:[#allocation2 + $0x78] sm:$0xff]
    %91 = vxpose.xlu0.b32.start [1/16] %v43, 128
    %92 = vxpose.xlu0.b32.cont [2/16] %v44, 128
    %93 = vxpose.xlu0.b32.cont [3/16] %v45, 128
    %94 = vxpose.xlu0.b32.cont [4/16] %v46, 128
    %95 = vxpose.xlu0.b32.cont [5/16] %v47, 128
    %96 = vxpose.xlu0.b32.cont [6/16] %v48, 128
    %97 = vxpose.xlu0.b32.cont [7/16] %v49, 128
    %98 = vxpose.xlu0.b32.cont [8/16] %v50, 128
    %99 = vxpose.xlu0.b32.cont [9/16] %v51, 128
    %100 = vxpose.xlu0.b32.cont [10/16] %v52, 128
    %101 = vxpose.xlu0.b32.cont [11/16] %v53, 128
    %102 = vxpose.xlu0.b32.cont [12/16] %v54, 128
    %103 = vxpose.xlu0.b32.cont [13/16] %v55, 128
    %104 = vxpose.xlu0.b32.cont [14/16] %v56, 128
    %105 = vxpose.xlu0.b32.cont [15/16] %v57, 128
    %106 = vxpose.xlu0.b32.end [16/16] %v58, 128
    %v107 = vpop.trf.xlu0
    %v108 = vpop.trf.xlu0
    %v109 = vpop.trf.xlu0
    %v110 = vpop.trf.xlu0
    %v111 = vpop.trf.xlu0
    %v112 = vpop.trf.xlu0
    %v113 = vpop.trf.xlu0
    %v114 = vpop.trf.xlu0
    %v115 = vpop.trf.xlu0
    %v116 = vpop.trf.xlu0
    %v117 = vpop.trf.xlu0
    %v118 = vpop.trf.xlu0
    %v119 = vpop.trf.xlu0
    %v120 = vpop.trf.xlu0
    %v121 = vpop.trf.xlu0
    %v122 = vpop.trf.xlu0
    %123 = vxpose.xlu0.b32.start [1/16] %v59, 128
    %124 = vxpose.xlu0.b32.cont [2/16] %v60, 128
    %125 = vxpose.xlu0.b32.cont [3/16] %v61, 128
    %126 = vxpose.xlu0.b32.cont [4/16] %v62, 128
    %127 = vxpose.xlu0.b32.cont [5/16] %v63, 128
    %128 = vxpose.xlu0.b32.cont [6/16] %v64, 128
    %129 = vxpose.xlu0.b32.cont [7/16] %v65, 128
    %130 = vxpose.xlu0.b32.cont [8/16] %v66, 128
    %131 = vxpose.xlu0.b32.cont [9/16] %v67, 128
    %132 = vxpose.xlu0.b32.cont [10/16] %v68, 128
    %133 = vxpose.xlu0.b32.cont [11/16] %v69, 128
    %134 = vxpose.xlu0.b32.cont [12/16] %v70, 128
    %135 = vxpose.xlu0.b32.cont [13/16] %v71, 128
    %136 = vxpose.xlu0.b32.cont [14/16] %v72, 128
    %137 = vxpose.xlu0.b32.cont [15/16] %v73, 128
    %138 = vxpose.xlu0.b32.end [16/16] %v74, 128
    %v139 = vpop.trf.xlu0
    %v140 = vpop.trf.xlu0
    %v141 = vpop.trf.xlu0
    %v142 = vpop.trf.xlu0
    %v143 = vpop.trf.xlu0
    %v144 = vpop.trf.xlu0
    %v145 = vpop.trf.xlu0
    %v146 = vpop.trf.xlu0
    %v147 = vpop.trf.xlu0
    %v148 = vpop.trf.xlu0
    %v149 = vpop.trf.xlu0
    %v150 = vpop.trf.xlu0
    %v151 = vpop.trf.xlu0
    %v152 = vpop.trf.xlu0
    %v153 = vpop.trf.xlu0
    %v154 = vpop.trf.xlu0
    %155 = vmatprep.subr.mxu0 0.0
    %v156 = vand.u32 %v58, 4294901760
    %157 = vmatpush1.msra.mxu0 %v156
    %158 = vmatprep.subr.mxu0 0.0
    %v159 = vand.u32 %v57, 4294901760
    %160 = vmatpush1.msra.mxu0 %v159
    %161 = vmatprep.subr.mxu0 0.0
    %v162 = vand.u32 %v56, 4294901760
    %163 = vmatpush1.msra.mxu0 %v162
    %164 = vmatprep.subr.mxu0 0.0
    %v165 = vand.u32 %v55, 4294901760
    %166 = vmatpush1.msra.mxu0 %v165
    %167 = vmatprep.subr.mxu0 0.0
    %v168 = vand.u32 %v54, 4294901760
    %169 = vmatpush1.msra.mxu0 %v168
    %170 = vmatprep.subr.mxu0 0.0
    %v171 = vand.u32 %v53, 4294901760
    %172 = vmatpush1.msra.mxu0 %v171
    %173 = vmatprep.subr.mxu0 0.0
    %v174 = vand.u32 %v52, 4294901760
    %175 = vmatpush1.msra.mxu0 %v174
    %176 = vmatprep.subr.mxu0 0.0
    %v177 = vand.u32 %v51, 4294901760
    %178 = vmatpush1.msra.mxu0 %v177
    %179 = vmatprep.subr.mxu0 0.0
    %v180 = vand.u32 %v50, 4294901760
    %181 = vmatpush1.msra.mxu0 %v180
    %182 = vmatprep.subr.mxu0 0.0
    %v183 = vand.u32 %v49, 4294901760
    %184 = vmatpush1.msra.mxu0 %v183
    %185 = vmatprep.subr.mxu0 0.0
    %v186 = vand.u32 %v48, 4294901760
    %187 = vmatpush1.msra.mxu0 %v186
    %188 = vmatprep.subr.mxu0 0.0
    %v189 = vand.u32 %v47, 4294901760
    %190 = vmatpush1.msra.mxu0 %v189
    %191 = vmatprep.subr.mxu0 0.0
    %v192 = vand.u32 %v46, 4294901760
    %193 = vmatpush1.msra.mxu0 %v192
    %194 = vmatprep.subr.mxu0 0.0
    %v195 = vand.u32 %v45, 4294901760
    %196 = vmatpush1.msra.mxu0 %v195
    %197 = vmatprep.subr.mxu0 0.0
    %v198 = vand.u32 %v44, 4294901760
    %199 = vmatpush1.msra.mxu0 %v198
    %200 = vmatprep.subr.mxu0 0.0
    %v201 = vand.u32 %v43, 4294901760
    %202 = vmatpush1.msra.mxu0 %v201
    %203 = vmatprep.subr.mxu0 0.0
    %v204 = vand.u32 %v74, 4294901760
    %205 = vmatpush2.msra.mxu0 %v204
    %206 = vmatprep.subr.mxu0 0.0
    %v207 = vand.u32 %v73, 4294901760
    %208 = vmatpush2.msra.mxu0 %v207
    %209 = vmatprep.subr.mxu0 0.0
    %v210 = vand.u32 %v72, 4294901760
    %211 = vmatpush2.msra.mxu0 %v210
    %212 = vmatprep.subr.mxu0 0.0
    %v213 = vand.u32 %v71, 4294901760
    %214 = vmatpush2.msra.mxu0 %v213
    %215 = vmatprep.subr.mxu0 0.0
    %v216 = vand.u32 %v70, 4294901760
    %217 = vmatpush2.msra.mxu0 %v216
    %218 = vmatprep.subr.mxu0 0.0
    %v219 = vand.u32 %v69, 4294901760
    %220 = vmatpush2.msra.mxu0 %v219
    %221 = vmatprep.subr.mxu0 0.0
    %v222 = vand.u32 %v68, 4294901760
    %223 = vmatpush2.msra.mxu0 %v222
    %224 = vmatprep.subr.mxu0 0.0
    %v225 = vand.u32 %v67, 4294901760
    %226 = vmatpush2.msra.mxu0 %v225
    %227 = vmatprep.subr.mxu0 0.0
    %v228 = vand.u32 %v66, 4294901760
    %229 = vmatpush2.msra.mxu0 %v228
    %230 = vmatprep.subr.mxu0 0.0
    %v231 = vand.u32 %v65, 4294901760
    %232 = vmatpush2.msra.mxu0 %v231
    %233 = vmatprep.subr.mxu0 0.0
    %v234 = vand.u32 %v64, 4294901760
    %235 = vmatpush2.msra.mxu0 %v234
    %236 = vmatprep.subr.mxu0 0.0
    %v237 = vand.u32 %v63, 4294901760
    %238 = vmatpush2.msra.mxu0 %v237
    %239 = vmatprep.subr.mxu0 0.0
    %v240 = vand.u32 %v62, 4294901760
    %241 = vmatpush2.msra.mxu0 %v240
    %242 = vmatprep.subr.mxu0 0.0
    %v243 = vand.u32 %v61, 4294901760
    %244 = vmatpush2.msra.mxu0 %v243
    %245 = vmatprep.subr.mxu0 0.0
    %v246 = vand.u32 %v60, 4294901760
    %247 = vmatpush2.msra.mxu0 %v246
    %248 = vmatprep.subr.mxu0 0.0
    %v249 = vand.u32 %v59, 4294901760
    %250 = vmatpush2.msra.mxu0 %v249
    %v251 = vand.u32 %v139, 4294901760
    %v252 = vsub.f32 %v139, %v251
    %v253 = vand.u32 %v252, 4294901760
    %v254 = vsub.f32 %v252, %v253
    %v255 = vand.u32 %v254, 4294901760
    %256 = vmatprep.mubr.f32.mxu0 %v255
    %v257 = vand.u32 %v107, 4294901760
    %v258 = vsub.f32 %v107, %v257
    %v259 = vand.u32 %v258, 4294901760
    %v260 = vsub.f32 %v258, %v259
    %v261 = vand.u32 %v260, 4294901760
    %262 = vmatmul.mubr.f32.gmra.mxu0 %v261
    %v263 = vpop.f32.mrf.mxu0
    %v264 = vadd.f32 0.0, %v263
    %v265 = vpop.f32.mrf.mxu0
    %v266 = vand.u32 %v140, 4294901760
    %v267 = vsub.f32 %v140, %v266
    %v268 = vand.u32 %v267, 4294901760
    %v269 = vsub.f32 %v267, %v268
    %v270 = vand.u32 %v269, 4294901760
    %271 = vmatprep.mubr.f32.mxu0 %v270
    %v272 = vand.u32 %v108, 4294901760
    %v273 = vsub.f32 %v108, %v272
    %v274 = vand.u32 %v273, 4294901760
    %v275 = vsub.f32 %v273, %v274
    %v276 = vand.u32 %v275, 4294901760
    %277 = vmatmul.mubr.f32.gmra.mxu0 %v276
    %v278 = vpop.f32.mrf.mxu0
    %v279 = vadd.f32 0.0, %v278
    %v280 = vpop.f32.mrf.mxu0
    %v281 = vand.u32 %v141, 4294901760
    %v282 = vsub.f32 %v141, %v281
    %v283 = vand.u32 %v282, 4294901760
    %v284 = vsub.f32 %v282, %v283
    %v285 = vand.u32 %v284, 4294901760
    %286 = vmatprep.mubr.f32.mxu0 %v285
    %v287 = vand.u32 %v109, 4294901760
    %v288 = vsub.f32 %v109, %v287
    %v289 = vand.u32 %v288, 4294901760
    %v290 = vsub.f32 %v288, %v289
    %v291 = vand.u32 %v290, 4294901760
    %292 = vmatmul.mubr.f32.gmra.mxu0 %v291
    %v293 = vpop.f32.mrf.mxu0
    %v294 = vadd.f32 0.0, %v293
    %v295 = vpop.f32.mrf.mxu0
    %v296 = vand.u32 %v142, 4294901760
    %v297 = vsub.f32 %v142, %v296
    %v298 = vand.u32 %v297, 4294901760
    %v299 = vsub.f32 %v297, %v298
    %v300 = vand.u32 %v299, 4294901760
    %301 = vmatprep.mubr.f32.mxu0 %v300
    %v302 = vand.u32 %v110, 4294901760
    %v303 = vsub.f32 %v110, %v302
    %v304 = vand.u32 %v303, 4294901760
    %v305 = vsub.f32 %v303, %v304
    %v306 = vand.u32 %v305, 4294901760
    %307 = vmatmul.mubr.f32.gmra.mxu0 %v306
    %v308 = vpop.f32.mrf.mxu0
    %v309 = vadd.f32 0.0, %v308
    %v310 = vpop.f32.mrf.mxu0
    %v311 = vand.u32 %v143, 4294901760
    %v312 = vsub.f32 %v143, %v311
    %v313 = vand.u32 %v312, 4294901760
    %v314 = vsub.f32 %v312, %v313
    %v315 = vand.u32 %v314, 4294901760
    %316 = vmatprep.mubr.f32.mxu0 %v315
    %v317 = vand.u32 %v111, 4294901760
    %v318 = vsub.f32 %v111, %v317
    %v319 = vand.u32 %v318, 4294901760
    %v320 = vsub.f32 %v318, %v319
    %v321 = vand.u32 %v320, 4294901760
    %322 = vmatmul.mubr.f32.gmra.mxu0 %v321
    %v323 = vpop.f32.mrf.mxu0
    %v324 = vadd.f32 0.0, %v323
    %v325 = vpop.f32.mrf.mxu0
    %v326 = vand.u32 %v144, 4294901760
    %v327 = vsub.f32 %v144, %v326
    %v328 = vand.u32 %v327, 4294901760
    %v329 = vsub.f32 %v327, %v328
    %v330 = vand.u32 %v329, 4294901760
    %331 = vmatprep.mubr.f32.mxu0 %v330
    %v332 = vand.u32 %v112, 4294901760
    %v333 = vsub.f32 %v112, %v332
    %v334 = vand.u32 %v333, 4294901760
    %v335 = vsub.f32 %v333, %v334
    %v336 = vand.u32 %v335, 4294901760
    %337 = vmatmul.mubr.f32.gmra.mxu0 %v336
    %v338 = vpop.f32.mrf.mxu0
    %v339 = vadd.f32 0.0, %v338
    %v340 = vpop.f32.mrf.mxu0
    %v341 = vand.u32 %v145, 4294901760
    %v342 = vsub.f32 %v145, %v341
    %v343 = vand.u32 %v342, 4294901760
    %v344 = vsub.f32 %v342, %v343
    %v345 = vand.u32 %v344, 4294901760
    %346 = vmatprep.mubr.f32.mxu0 %v345
    %v347 = vand.u32 %v113, 4294901760
    %v348 = vsub.f32 %v113, %v347
    %v349 = vand.u32 %v348, 4294901760
    %v350 = vsub.f32 %v348, %v349
    %v351 = vand.u32 %v350, 4294901760
    %352 = vmatmul.mubr.f32.gmra.mxu0 %v351
    %v353 = vpop.f32.mrf.mxu0
    %v354 = vadd.f32 0.0, %v353
    %v355 = vpop.f32.mrf.mxu0
    %v356 = vand.u32 %v146, 4294901760
    %v357 = vsub.f32 %v146, %v356
    %v358 = vand.u32 %v357, 4294901760
    %v359 = vsub.f32 %v357, %v358
    %v360 = vand.u32 %v359, 4294901760
    %361 = vmatprep.mubr.f32.mxu0 %v360
    %v362 = vand.u32 %v114, 4294901760
    %v363 = vsub.f32 %v114, %v362
    %v364 = vand.u32 %v363, 4294901760
    %v365 = vsub.f32 %v363, %v364
    %v366 = vand.u32 %v365, 4294901760
    %367 = vmatmul.mubr.f32.gmra.mxu0 %v366
    %v368 = vpop.f32.mrf.mxu0
    %v369 = vadd.f32 0.0, %v368
    %v370 = vpop.f32.mrf.mxu0
    %v371 = vand.u32 %v147, 4294901760
    %v372 = vsub.f32 %v147, %v371
    %v373 = vand.u32 %v372, 4294901760
    %v374 = vsub.f32 %v372, %v373
    %v375 = vand.u32 %v374, 4294901760
    %376 = vmatprep.mubr.f32.mxu0 %v375
    %v377 = vand.u32 %v115, 4294901760
    %v378 = vsub.f32 %v115, %v377
    %v379 = vand.u32 %v378, 4294901760
    %v380 = vsub.f32 %v378, %v379
    %v381 = vand.u32 %v380, 4294901760
    %382 = vmatmul.mubr.f32.gmra.mxu0 %v381
    %v383 = vpop.f32.mrf.mxu0
    %v384 = vadd.f32 0.0, %v383
    %v385 = vpop.f32.mrf.mxu0
    %v386 = vand.u32 %v148, 4294901760
    %v387 = vsub.f32 %v148, %v386
    %v388 = vand.u32 %v387, 4294901760
    %v389 = vsub.f32 %v387, %v388
    %v390 = vand.u32 %v389, 4294901760
    %391 = vmatprep.mubr.f32.mxu0 %v390
    %v392 = vand.u32 %v116, 4294901760
    %v393 = vsub.f32 %v116, %v392
    %v394 = vand.u32 %v393, 4294901760
    %v395 = vsub.f32 %v393, %v394
    %v396 = vand.u32 %v395, 4294901760
    %397 = vmatmul.mubr.f32.gmra.mxu0 %v396
    %v398 = vpop.f32.mrf.mxu0
    %v399 = vadd.f32 0.0, %v398
    %v400 = vpop.f32.mrf.mxu0
    %v401 = vand.u32 %v149, 4294901760
    %v402 = vsub.f32 %v149, %v401
    %v403 = vand.u32 %v402, 4294901760
    %v404 = vsub.f32 %v402, %v403
    %v405 = vand.u32 %v404, 4294901760
    %406 = vmatprep.mubr.f32.mxu0 %v405
    %v407 = vand.u32 %v117, 4294901760
    %v408 = vsub.f32 %v117, %v407
    %v409 = vand.u32 %v408, 4294901760
    %v410 = vsub.f32 %v408, %v409
    %v411 = vand.u32 %v410, 4294901760
    %412 = vmatmul.mubr.f32.gmra.mxu0 %v411
    %v413 = vpop.f32.mrf.mxu0
    %v414 = vadd.f32 0.0, %v413
    %v415 = vpop.f32.mrf.mxu0
    %v416 = vand.u32 %v150, 4294901760
    %v417 = vsub.f32 %v150, %v416
    %v418 = vand.u32 %v417, 4294901760
    %v419 = vsub.f32 %v417, %v418
    %v420 = vand.u32 %v419, 4294901760
    %421 = vmatprep.mubr.f32.mxu0 %v420
    %v422 = vand.u32 %v118, 4294901760
    %v423 = vsub.f32 %v118, %v422
    %v424 = vand.u32 %v423, 4294901760
    %v425 = vsub.f32 %v423, %v424
    %v426 = vand.u32 %v425, 4294901760
    %427 = vmatmul.mubr.f32.gmra.mxu0 %v426
    %v428 = vpop.f32.mrf.mxu0
    %v429 = vadd.f32 0.0, %v428
    %v430 = vpop.f32.mrf.mxu0
    %v431 = vand.u32 %v151, 4294901760
    %v432 = vsub.f32 %v151, %v431
    %v433 = vand.u32 %v432, 4294901760
    %v434 = vsub.f32 %v432, %v433
    %v435 = vand.u32 %v434, 4294901760
    %436 = vmatprep.mubr.f32.mxu0 %v435
    %v437 = vand.u32 %v119, 4294901760
    %v438 = vsub.f32 %v119, %v437
    %v439 = vand.u32 %v438, 4294901760
    %v440 = vsub.f32 %v438, %v439
    %v441 = vand.u32 %v440, 4294901760
    %442 = vmatmul.mubr.f32.gmra.mxu0 %v441
    %v443 = vpop.f32.mrf.mxu0
    %v444 = vadd.f32 0.0, %v443
    %v445 = vpop.f32.mrf.mxu0
    %v446 = vand.u32 %v152, 4294901760
    %v447 = vsub.f32 %v152, %v446
    %v448 = vand.u32 %v447, 4294901760
    %v449 = vsub.f32 %v447, %v448
    %v450 = vand.u32 %v449, 4294901760
    %451 = vmatprep.mubr.f32.mxu0 %v450
    %v452 = vand.u32 %v120, 4294901760
    %v453 = vsub.f32 %v120, %v452
    %v454 = vand.u32 %v453, 4294901760
    %v455 = vsub.f32 %v453, %v454
    %v456 = vand.u32 %v455, 4294901760
    %457 = vmatmul.mubr.f32.gmra.mxu0 %v456
    %v458 = vpop.f32.mrf.mxu0
    %v459 = vadd.f32 0.0, %v458
    %v460 = vpop.f32.mrf.mxu0
    %v461 = vand.u32 %v153, 4294901760
    %v462 = vsub.f32 %v153, %v461
    %v463 = vand.u32 %v462, 4294901760
    %v464 = vsub.f32 %v462, %v463
    %v465 = vand.u32 %v464, 4294901760
    %466 = vmatprep.mubr.f32.mxu0 %v465
    %v467 = vand.u32 %v121, 4294901760
    %v468 = vsub.f32 %v121, %v467
    %v469 = vand.u32 %v468, 4294901760
    %v470 = vsub.f32 %v468, %v469
    %v471 = vand.u32 %v470, 4294901760
    %472 = vmatmul.mubr.f32.gmra.mxu0 %v471
    %v473 = vpop.f32.mrf.mxu0
    %v474 = vadd.f32 0.0, %v473
    %v475 = vpop.f32.mrf.mxu0
    %v476 = vand.u32 %v154, 4294901760
    %v477 = vsub.f32 %v154, %v476
    %v478 = vand.u32 %v477, 4294901760
    %v479 = vsub.f32 %v477, %v478
    %v480 = vand.u32 %v479, 4294901760
    %481 = vmatprep.mubr.f32.mxu0 %v480
    %v482 = vand.u32 %v122, 4294901760
    %v483 = vsub.f32 %v122, %v482
    %v484 = vand.u32 %v483, 4294901760
    %v485 = vsub.f32 %v483, %v484
    %v486 = vand.u32 %v485, 4294901760
    %487 = vmatmul.mubr.f32.gmra.mxu0 %v486
    %v488 = vpop.f32.mrf.mxu0
    %v489 = vadd.f32 0.0, %v488
    %v490 = vpop.f32.mrf.mxu0
    %491 = vdwg.mxu0
    %492 = vmatprep.subr.mxu0 0.0
    %v493 = vand.u32 %v58, 4294901760
    %v494 = vsub.f32 %v58, %v493
    %v495 = vand.u32 %v494, 4294901760
    %v496 = vsub.f32 %v494, %v495
    %v497 = vand.u32 %v496, 4294901760
    %498 = vmatpush1.msra.mxu0 %v497
    %499 = vmatprep.subr.mxu0 0.0
    %v500 = vand.u32 %v57, 4294901760
    %v501 = vsub.f32 %v57, %v500
    %v502 = vand.u32 %v501, 4294901760
    %v503 = vsub.f32 %v501, %v502
    %v504 = vand.u32 %v503, 4294901760
    %505 = vmatpush1.msra.mxu0 %v504
    %506 = vmatprep.subr.mxu0 0.0
    %v507 = vand.u32 %v56, 4294901760
    %v508 = vsub.f32 %v56, %v507
    %v509 = vand.u32 %v508, 4294901760
    %v510 = vsub.f32 %v508, %v509
    %v511 = vand.u32 %v510, 4294901760
    %512 = vmatpush1.msra.mxu0 %v511
    %513 = vmatprep.subr.mxu0 0.0
    %v514 = vand.u32 %v55, 4294901760
    %v515 = vsub.f32 %v55, %v514
    %v516 = vand.u32 %v515, 4294901760
    %v517 = vsub.f32 %v515, %v516
    %v518 = vand.u32 %v517, 4294901760
    %519 = vmatpush1.msra.mxu0 %v518
    %520 = vmatprep.subr.mxu0 0.0
    %v521 = vand.u32 %v54, 4294901760
    %v522 = vsub.f32 %v54, %v521
    %v523 = vand.u32 %v522, 4294901760
    %v524 = vsub.f32 %v522, %v523
    %v525 = vand.u32 %v524, 4294901760
    %526 = vmatpush1.msra.mxu0 %v525
    %527 = vmatprep.subr.mxu0 0.0
    %v528 = vand.u32 %v53, 4294901760
    %v529 = vsub.f32 %v53, %v528
    %v530 = vand.u32 %v529, 4294901760
    %v531 = vsub.f32 %v529, %v530
    %v532 = vand.u32 %v531, 4294901760
    %533 = vmatpush1.msra.mxu0 %v532
    %534 = vmatprep.subr.mxu0 0.0
    %v535 = vand.u32 %v52, 4294901760
    %v536 = vsub.f32 %v52, %v535
    %v537 = vand.u32 %v536, 4294901760
    %v538 = vsub.f32 %v536, %v537
    %v539 = vand.u32 %v538, 4294901760
    %540 = vmatpush1.msra.mxu0 %v539
    %541 = vmatprep.subr.mxu0 0.0
    %v542 = vand.u32 %v51, 4294901760
    %v543 = vsub.f32 %v51, %v542
    %v544 = vand.u32 %v543, 4294901760
    %v545 = vsub.f32 %v543, %v544
    %v546 = vand.u32 %v545, 4294901760
    %547 = vmatpush1.msra.mxu0 %v546
    %548 = vmatprep.subr.mxu0 0.0
    %v549 = vand.u32 %v50, 4294901760
    %v550 = vsub.f32 %v50, %v549
    %v551 = vand.u32 %v550, 4294901760
    %v552 = vsub.f32 %v550, %v551
    %v553 = vand.u32 %v552, 4294901760
    %554 = vmatpush1.msra.mxu0 %v553
    %555 = vmatprep.subr.mxu0 0.0
    %v556 = vand.u32 %v49, 4294901760
    %v557 = vsub.f32 %v49, %v556
    %v558 = vand.u32 %v557, 4294901760
    %v559 = vsub.f32 %v557, %v558
    %v560 = vand.u32 %v559, 4294901760
    %561 = vmatpush1.msra.mxu0 %v560
    %562 = vmatprep.subr.mxu0 0.0
    %v563 = vand.u32 %v48, 4294901760
    %v564 = vsub.f32 %v48, %v563
    %v565 = vand.u32 %v564, 4294901760
    %v566 = vsub.f32 %v564, %v565
    %v567 = vand.u32 %v566, 4294901760
    %568 = vmatpush1.msra.mxu0 %v567
    %569 = vmatprep.subr.mxu0 0.0
    %v570 = vand.u32 %v47, 4294901760
    %v571 = vsub.f32 %v47, %v570
    %v572 = vand.u32 %v571, 4294901760
    %v573 = vsub.f32 %v571, %v572
    %v574 = vand.u32 %v573, 4294901760
    %575 = vmatpush1.msra.mxu0 %v574
    %576 = vmatprep.subr.mxu0 0.0
    %v577 = vand.u32 %v46, 4294901760
    %v578 = vsub.f32 %v46, %v577
    %v579 = vand.u32 %v578, 4294901760
    %v580 = vsub.f32 %v578, %v579
    %v581 = vand.u32 %v580, 4294901760
    %582 = vmatpush1.msra.mxu0 %v581
    %583 = vmatprep.subr.mxu0 0.0
    %v584 = vand.u32 %v45, 4294901760
    %v585 = vsub.f32 %v45, %v584
    %v586 = vand.u32 %v585, 4294901760
    %v587 = vsub.f32 %v585, %v586
    %v588 = vand.u32 %v587, 4294901760
    %589 = vmatpush1.msra.mxu0 %v588
    %590 = vmatprep.subr.mxu0 0.0
    %v591 = vand.u32 %v44, 4294901760
    %v592 = vsub.f32 %v44, %v591
    %v593 = vand.u32 %v592, 4294901760
    %v594 = vsub.f32 %v592, %v593
    %v595 = vand.u32 %v594, 4294901760
    %596 = vmatpush1.msra.mxu0 %v595
    %597 = vmatprep.subr.mxu0 0.0
    %v598 = vand.u32 %v43, 4294901760
    %v599 = vsub.f32 %v43, %v598
    %v600 = vand.u32 %v599, 4294901760
    %v601 = vsub.f32 %v599, %v600
    %v602 = vand.u32 %v601, 4294901760
    %603 = vmatpush1.msra.mxu0 %v602
    %604 = vmatprep.subr.mxu0 0.0
    %v605 = vand.u32 %v74, 4294901760
    %v606 = vsub.f32 %v74, %v605
    %v607 = vand.u32 %v606, 4294901760
    %v608 = vsub.f32 %v606, %v607
    %v609 = vand.u32 %v608, 4294901760
    %610 = vmatpush2.msra.mxu0 %v609
    %611 = vmatprep.subr.mxu0 0.0
    %v612 = vand.u32 %v73, 4294901760
    %v613 = vsub.f32 %v73, %v612
    %v614 = vand.u32 %v613, 4294901760
    %v615 = vsub.f32 %v613, %v614
    %v616 = vand.u32 %v615, 4294901760
    %617 = vmatpush2.msra.mxu0 %v616
    %618 = vmatprep.subr.mxu0 0.0
    %v619 = vand.u32 %v72, 4294901760
    %v620 = vsub.f32 %v72, %v619
    %v621 = vand.u32 %v620, 4294901760
    %v622 = vsub.f32 %v620, %v621
    %v623 = vand.u32 %v622, 4294901760
    %624 = vmatpush2.msra.mxu0 %v623
    %625 = vmatprep.subr.mxu0 0.0
    %v626 = vand.u32 %v71, 4294901760
    %v627 = vsub.f32 %v71, %v626
    %v628 = vand.u32 %v627, 4294901760
    %v629 = vsub.f32 %v627, %v628
    %v630 = vand.u32 %v629, 4294901760
    %631 = vmatpush2.msra.mxu0 %v630
    %632 = vmatprep.subr.mxu0 0.0
    %v633 = vand.u32 %v70, 4294901760
    %v634 = vsub.f32 %v70, %v633
    %v635 = vand.u32 %v634, 4294901760
    %v636 = vsub.f32 %v634, %v635
    %v637 = vand.u32 %v636, 4294901760
    %638 = vmatpush2.msra.mxu0 %v637
    %639 = vmatprep.subr.mxu0 0.0
    %v640 = vand.u32 %v69, 4294901760
    %v641 = vsub.f32 %v69, %v640
    %v642 = vand.u32 %v641, 4294901760
    %v643 = vsub.f32 %v641, %v642
    %v644 = vand.u32 %v643, 4294901760
    %645 = vmatpush2.msra.mxu0 %v644
    %646 = vmatprep.subr.mxu0 0.0
    %v647 = vand.u32 %v68, 4294901760
    %v648 = vsub.f32 %v68, %v647
    %v649 = vand.u32 %v648, 4294901760
    %v650 = vsub.f32 %v648, %v649
    %v651 = vand.u32 %v650, 4294901760
    %652 = vmatpush2.msra.mxu0 %v651
    %653 = vmatprep.subr.mxu0 0.0
    %v654 = vand.u32 %v67, 4294901760
    %v655 = vsub.f32 %v67, %v654
    %v656 = vand.u32 %v655, 4294901760
    %v657 = vsub.f32 %v655, %v656
    %v658 = vand.u32 %v657, 4294901760
    %659 = vmatpush2.msra.mxu0 %v658
    %660 = vmatprep.subr.mxu0 0.0
    %v661 = vand.u32 %v66, 4294901760
    %v662 = vsub.f32 %v66, %v661
    %v663 = vand.u32 %v662, 4294901760
    %v664 = vsub.f32 %v662, %v663
    %v665 = vand.u32 %v664, 4294901760
    %666 = vmatpush2.msra.mxu0 %v665
    %667 = vmatprep.subr.mxu0 0.0
    %v668 = vand.u32 %v65, 4294901760
    %v669 = vsub.f32 %v65, %v668
    %v670 = vand.u32 %v669, 4294901760
    %v671 = vsub.f32 %v669, %v670
    %v672 = vand.u32 %v671, 4294901760
    %673 = vmatpush2.msra.mxu0 %v672
    %674 = vmatprep.subr.mxu0 0.0
    %v675 = vand.u32 %v64, 4294901760
    %v676 = vsub.f32 %v64, %v675
    %v677 = vand.u32 %v676, 4294901760
    %v678 = vsub.f32 %v676, %v677
    %v679 = vand.u32 %v678, 4294901760
    %680 = vmatpush2.msra.mxu0 %v679
    %681 = vmatprep.subr.mxu0 0.0
    %v682 = vand.u32 %v63, 4294901760
    %v683 = vsub.f32 %v63, %v682
    %v684 = vand.u32 %v683, 4294901760
    %v685 = vsub.f32 %v683, %v684
    %v686 = vand.u32 %v685, 4294901760
    %687 = vmatpush2.msra.mxu0 %v686
    %688 = vmatprep.subr.mxu0 0.0
    %v689 = vand.u32 %v62, 4294901760
    %v690 = vsub.f32 %v62, %v689
    %v691 = vand.u32 %v690, 4294901760
    %v692 = vsub.f32 %v690, %v691
    %v693 = vand.u32 %v692, 4294901760
    %694 = vmatpush2.msra.mxu0 %v693
    %695 = vmatprep.subr.mxu0 0.0
    %v696 = vand.u32 %v61, 4294901760
    %v697 = vsub.f32 %v61, %v696
    %v698 = vand.u32 %v697, 4294901760
    %v699 = vsub.f32 %v697, %v698
    %v700 = vand.u32 %v699, 4294901760
    %701 = vmatpush2.msra.mxu0 %v700
    %702 = vmatprep.subr.mxu0 0.0
    %v703 = vand.u32 %v60, 4294901760
    %v704 = vsub.f32 %v60, %v703
    %v705 = vand.u32 %v704, 4294901760
    %v706 = vsub.f32 %v704, %v705
    %v707 = vand.u32 %v706, 4294901760
    %708 = vmatpush2.msra.mxu0 %v707
    %709 = vmatprep.subr.mxu0 0.0
    %v710 = vand.u32 %v59, 4294901760
    %v711 = vsub.f32 %v59, %v710
    %v712 = vand.u32 %v711, 4294901760
    %v713 = vsub.f32 %v711, %v712
    %v714 = vand.u32 %v713, 4294901760
    %715 = vmatpush2.msra.mxu0 %v714
    %v716 = vand.u32 %v139, 4294901760
    %717 = vmatprep.mubr.f32.mxu0 %v716
    %v718 = vand.u32 %v107, 4294901760
    %719 = vmatmul.mubr.f32.gmra.mxu0 %v718
    %v720 = vpop.f32.mrf.mxu0
    %v721 = vadd.f32 %v264, %v720
    %v722 = vpop.f32.mrf.mxu0
    %v723 = vand.u32 %v140, 4294901760
    %724 = vmatprep.mubr.f32.mxu0 %v723
    %v725 = vand.u32 %v108, 4294901760
    %726 = vmatmul.mubr.f32.gmra.mxu0 %v725
    %v727 = vpop.f32.mrf.mxu0
    %v728 = vadd.f32 %v279, %v727
    %v729 = vpop.f32.mrf.mxu0
    %v730 = vand.u32 %v141, 4294901760
    %731 = vmatprep.mubr.f32.mxu0 %v730
    %v732 = vand.u32 %v109, 4294901760
    %733 = vmatmul.mubr.f32.gmra.mxu0 %v732
    %v734 = vpop.f32.mrf.mxu0
    %v735 = vadd.f32 %v294, %v734
    %v736 = vpop.f32.mrf.mxu0
    %v737 = vand.u32 %v142, 4294901760
    %738 = vmatprep.mubr.f32.mxu0 %v737
    %v739 = vand.u32 %v110, 4294901760
    %740 = vmatmul.mubr.f32.gmra.mxu0 %v739
    %v741 = vpop.f32.mrf.mxu0
    %v742 = vadd.f32 %v309, %v741
    %v743 = vpop.f32.mrf.mxu0
    %v744 = vand.u32 %v143, 4294901760
    %745 = vmatprep.mubr.f32.mxu0 %v744
    %v746 = vand.u32 %v111, 4294901760
    %747 = vmatmul.mubr.f32.gmra.mxu0 %v746
    %v748 = vpop.f32.mrf.mxu0
    %v749 = vadd.f32 %v324, %v748
    %v750 = vpop.f32.mrf.mxu0
    %v751 = vand.u32 %v144, 4294901760
    %752 = vmatprep.mubr.f32.mxu0 %v751
    %v753 = vand.u32 %v112, 4294901760
    %754 = vmatmul.mubr.f32.gmra.mxu0 %v753
    %v755 = vpop.f32.mrf.mxu0
    %v756 = vadd.f32 %v339, %v755
    %v757 = vpop.f32.mrf.mxu0
    %v758 = vand.u32 %v145, 4294901760
    %759 = vmatprep.mubr.f32.mxu0 %v758
    %v760 = vand.u32 %v113, 4294901760
    %761 = vmatmul.mubr.f32.gmra.mxu0 %v760
    %v762 = vpop.f32.mrf.mxu0
    %v763 = vadd.f32 %v354, %v762
    %v764 = vpop.f32.mrf.mxu0
    %v765 = vand.u32 %v146, 4294901760
    %766 = vmatprep.mubr.f32.mxu0 %v765
    %v767 = vand.u32 %v114, 4294901760
    %768 = vmatmul.mubr.f32.gmra.mxu0 %v767
    %v769 = vpop.f32.mrf.mxu0
    %v770 = vadd.f32 %v369, %v769
    %v771 = vpop.f32.mrf.mxu0
    %v772 = vand.u32 %v147, 4294901760
    %773 = vmatprep.mubr.f32.mxu0 %v772
    %v774 = vand.u32 %v115, 4294901760
    %775 = vmatmul.mubr.f32.gmra.mxu0 %v774
    %v776 = vpop.f32.mrf.mxu0
    %v777 = vadd.f32 %v384, %v776
    %v778 = vpop.f32.mrf.mxu0
    %v779 = vand.u32 %v148, 4294901760
    %780 = vmatprep.mubr.f32.mxu0 %v779
    %v781 = vand.u32 %v116, 4294901760
    %782 = vmatmul.mubr.f32.gmra.mxu0 %v781
    %v783 = vpop.f32.mrf.mxu0
    %v784 = vadd.f32 %v399, %v783
    %v785 = vpop.f32.mrf.mxu0
    %v786 = vand.u32 %v149, 4294901760
    %787 = vmatprep.mubr.f32.mxu0 %v786
    %v788 = vand.u32 %v117, 4294901760
    %789 = vmatmul.mubr.f32.gmra.mxu0 %v788
    %v790 = vpop.f32.mrf.mxu0
    %v791 = vadd.f32 %v414, %v790
    %v792 = vpop.f32.mrf.mxu0
    %v793 = vand.u32 %v150, 4294901760
    %794 = vmatprep.mubr.f32.mxu0 %v793
    %v795 = vand.u32 %v118, 4294901760
    %796 = vmatmul.mubr.f32.gmra.mxu0 %v795
    %v797 = vpop.f32.mrf.mxu0
    %v798 = vadd.f32 %v429, %v797
    %v799 = vpop.f32.mrf.mxu0
    %v800 = vand.u32 %v151, 4294901760
    %801 = vmatprep.mubr.f32.mxu0 %v800
    %v802 = vand.u32 %v119, 4294901760
    %803 = vmatmul.mubr.f32.gmra.mxu0 %v802
    %v804 = vpop.f32.mrf.mxu0
    %v805 = vadd.f32 %v444, %v804
    %v806 = vpop.f32.mrf.mxu0
    %v807 = vand.u32 %v152, 4294901760
    %808 = vmatprep.mubr.f32.mxu0 %v807
    %v809 = vand.u32 %v120, 4294901760
    %810 = vmatmul.mubr.f32.gmra.mxu0 %v809
    %v811 = vpop.f32.mrf.mxu0
    %v812 = vadd.f32 %v459, %v811
    %v813 = vpop.f32.mrf.mxu0
    %v814 = vand.u32 %v153, 4294901760
    %815 = vmatprep.mubr.f32.mxu0 %v814
    %v816 = vand.u32 %v121, 4294901760
    %817 = vmatmul.mubr.f32.gmra.mxu0 %v816
    %v818 = vpop.f32.mrf.mxu0
    %v819 = vadd.f32 %v474, %v818
    %v820 = vpop.f32.mrf.mxu0
    %v821 = vand.u32 %v154, 4294901760
    %822 = vmatprep.mubr.f32.mxu0 %v821
    %v823 = vand.u32 %v122, 4294901760
    %824 = vmatmul.mubr.f32.gmra.mxu0 %v823
    %v825 = vpop.f32.mrf.mxu0
    %v826 = vadd.f32 %v489, %v825
    %v827 = vpop.f32.mrf.mxu0
    %828 = vdwg.mxu0
    %829 = vmatprep.subr.mxu0 0.0
    %v830 = vand.u32 %v58, 4294901760
    %v831 = vsub.f32 %v58, %v830
    %832 = vmatpush1.msra.mxu0 %v831
    %833 = vmatprep.subr.mxu0 0.0
    %v834 = vand.u32 %v57, 4294901760
    %v835 = vsub.f32 %v57, %v834
    %836 = vmatpush1.msra.mxu0 %v835
    %837 = vmatprep.subr.mxu0 0.0
    %v838 = vand.u32 %v56, 4294901760
    %v839 = vsub.f32 %v56, %v838
    %840 = vmatpush1.msra.mxu0 %v839
    %841 = vmatprep.subr.mxu0 0.0
    %v842 = vand.u32 %v55, 4294901760
    %v843 = vsub.f32 %v55, %v842
    %844 = vmatpush1.msra.mxu0 %v843
    %845 = vmatprep.subr.mxu0 0.0
    %v846 = vand.u32 %v54, 4294901760
    %v847 = vsub.f32 %v54, %v846
    %848 = vmatpush1.msra.mxu0 %v847
    %849 = vmatprep.subr.mxu0 0.0
    %v850 = vand.u32 %v53, 4294901760
    %v851 = vsub.f32 %v53, %v850
    %852 = vmatpush1.msra.mxu0 %v851
    %853 = vmatprep.subr.mxu0 0.0
    %v854 = vand.u32 %v52, 4294901760
    %v855 = vsub.f32 %v52, %v854
    %856 = vmatpush1.msra.mxu0 %v855
    %857 = vmatprep.subr.mxu0 0.0
    %v858 = vand.u32 %v51, 4294901760
    %v859 = vsub.f32 %v51, %v858
    %860 = vmatpush1.msra.mxu0 %v859
    %861 = vmatprep.subr.mxu0 0.0
    %v862 = vand.u32 %v50, 4294901760
    %v863 = vsub.f32 %v50, %v862
    %864 = vmatpush1.msra.mxu0 %v863
    %865 = vmatprep.subr.mxu0 0.0
    %v866 = vand.u32 %v49, 4294901760
    %v867 = vsub.f32 %v49, %v866
    %868 = vmatpush1.msra.mxu0 %v867
    %869 = vmatprep.subr.mxu0 0.0
    %v870 = vand.u32 %v48, 4294901760
    %v871 = vsub.f32 %v48, %v870
    %872 = vmatpush1.msra.mxu0 %v871
    %873 = vmatprep.subr.mxu0 0.0
    %v874 = vand.u32 %v47, 4294901760
    %v875 = vsub.f32 %v47, %v874
    %876 = vmatpush1.msra.mxu0 %v875
    %877 = vmatprep.subr.mxu0 0.0
    %v878 = vand.u32 %v46, 4294901760
    %v879 = vsub.f32 %v46, %v878
    %880 = vmatpush1.msra.mxu0 %v879
    %881 = vmatprep.subr.mxu0 0.0
    %v882 = vand.u32 %v45, 4294901760
    %v883 = vsub.f32 %v45, %v882
    %884 = vmatpush1.msra.mxu0 %v883
    %885 = vmatprep.subr.mxu0 0.0
    %v886 = vand.u32 %v44, 4294901760
    %v887 = vsub.f32 %v44, %v886
    %888 = vmatpush1.msra.mxu0 %v887
    %889 = vmatprep.subr.mxu0 0.0
    %v890 = vand.u32 %v43, 4294901760
    %v891 = vsub.f32 %v43, %v890
    %892 = vmatpush1.msra.mxu0 %v891
    %893 = vmatprep.subr.mxu0 0.0
    %v894 = vand.u32 %v74, 4294901760
    %v895 = vsub.f32 %v74, %v894
    %896 = vmatpush2.msra.mxu0 %v895
    %897 = vmatprep.subr.mxu0 0.0
    %v898 = vand.u32 %v73, 4294901760
    %v899 = vsub.f32 %v73, %v898
    %900 = vmatpush2.msra.mxu0 %v899
    %901 = vmatprep.subr.mxu0 0.0
    %v902 = vand.u32 %v72, 4294901760
    %v903 = vsub.f32 %v72, %v902
    %904 = vmatpush2.msra.mxu0 %v903
    %905 = vmatprep.subr.mxu0 0.0
    %v906 = vand.u32 %v71, 4294901760
    %v907 = vsub.f32 %v71, %v906
    %908 = vmatpush2.msra.mxu0 %v907
    %909 = vmatprep.subr.mxu0 0.0
    %v910 = vand.u32 %v70, 4294901760
    %v911 = vsub.f32 %v70, %v910
    %912 = vmatpush2.msra.mxu0 %v911
    %913 = vmatprep.subr.mxu0 0.0
    %v914 = vand.u32 %v69, 4294901760
    %v915 = vsub.f32 %v69, %v914
    %916 = vmatpush2.msra.mxu0 %v915
    %917 = vmatprep.subr.mxu0 0.0
    %v918 = vand.u32 %v68, 4294901760
    %v919 = vsub.f32 %v68, %v918
    %920 = vmatpush2.msra.mxu0 %v919
    %921 = vmatprep.subr.mxu0 0.0
    %v922 = vand.u32 %v67, 4294901760
    %v923 = vsub.f32 %v67, %v922
    %924 = vmatpush2.msra.mxu0 %v923
    %925 = vmatprep.subr.mxu0 0.0
    %v926 = vand.u32 %v66, 4294901760
    %v927 = vsub.f32 %v66, %v926
    %928 = vmatpush2.msra.mxu0 %v927
    %929 = vmatprep.subr.mxu0 0.0
    %v930 = vand.u32 %v65, 4294901760
    %v931 = vsub.f32 %v65, %v930
    %932 = vmatpush2.msra.mxu0 %v931
    %933 = vmatprep.subr.mxu0 0.0
    %v934 = vand.u32 %v64, 4294901760
    %v935 = vsub.f32 %v64, %v934
    %936 = vmatpush2.msra.mxu0 %v935
    %937 = vmatprep.subr.mxu0 0.0
    %v938 = vand.u32 %v63, 4294901760
    %v939 = vsub.f32 %v63, %v938
    %940 = vmatpush2.msra.mxu0 %v939
    %941 = vmatprep.subr.mxu0 0.0
    %v942 = vand.u32 %v62, 4294901760
    %v943 = vsub.f32 %v62, %v942
    %944 = vmatpush2.msra.mxu0 %v943
    %945 = vmatprep.subr.mxu0 0.0
    %v946 = vand.u32 %v61, 4294901760
    %v947 = vsub.f32 %v61, %v946
    %948 = vmatpush2.msra.mxu0 %v947
    %949 = vmatprep.subr.mxu0 0.0
    %v950 = vand.u32 %v60, 4294901760
    %v951 = vsub.f32 %v60, %v950
    %952 = vmatpush2.msra.mxu0 %v951
    %953 = vmatprep.subr.mxu0 0.0
    %v954 = vand.u32 %v59, 4294901760
    %v955 = vsub.f32 %v59, %v954
    %956 = vmatpush2.msra.mxu0 %v955
    %v957 = vand.u32 %v139, 4294901760
    %v958 = vsub.f32 %v139, %v957
    %959 = vmatprep.mubr.f32.mxu0 %v958
    %v960 = vand.u32 %v107, 4294901760
    %v961 = vsub.f32 %v107, %v960
    %962 = vmatmul.mubr.f32.gmra.mxu0 %v961
    %v963 = vpop.f32.mrf.mxu0
    %v964 = vadd.f32 %v721, %v963
    %v965 = vpop.f32.mrf.mxu0
    %v966 = vand.u32 %v140, 4294901760
    %v967 = vsub.f32 %v140, %v966
    %968 = vmatprep.mubr.f32.mxu0 %v967
    %v969 = vand.u32 %v108, 4294901760
    %v970 = vsub.f32 %v108, %v969
    %971 = vmatmul.mubr.f32.gmra.mxu0 %v970
    %v972 = vpop.f32.mrf.mxu0
    %v973 = vadd.f32 %v728, %v972
    %v974 = vpop.f32.mrf.mxu0
    %v975 = vand.u32 %v141, 4294901760
    %v976 = vsub.f32 %v141, %v975
    %977 = vmatprep.mubr.f32.mxu0 %v976
    %v978 = vand.u32 %v109, 4294901760
    %v979 = vsub.f32 %v109, %v978
    %980 = vmatmul.mubr.f32.gmra.mxu0 %v979
    %v981 = vpop.f32.mrf.mxu0
    %v982 = vadd.f32 %v735, %v981
    %v983 = vpop.f32.mrf.mxu0
    %v984 = vand.u32 %v142, 4294901760
    %v985 = vsub.f32 %v142, %v984
    %986 = vmatprep.mubr.f32.mxu0 %v985
    %v987 = vand.u32 %v110, 4294901760
    %v988 = vsub.f32 %v110, %v987
    %989 = vmatmul.mubr.f32.gmra.mxu0 %v988
    %v990 = vpop.f32.mrf.mxu0
    %v991 = vadd.f32 %v742, %v990
    %v992 = vpop.f32.mrf.mxu0
    %v993 = vand.u32 %v143, 4294901760
    %v994 = vsub.f32 %v143, %v993
    %995 = vmatprep.mubr.f32.mxu0 %v994
    %v996 = vand.u32 %v111, 4294901760
    %v997 = vsub.f32 %v111, %v996
    %998 = vmatmul.mubr.f32.gmra.mxu0 %v997
    %v999 = vpop.f32.mrf.mxu0
    %v1000 = vadd.f32 %v749, %v999
    %v1001 = vpop.f32.mrf.mxu0
    %v1002 = vand.u32 %v144, 4294901760
    %v1003 = vsub.f32 %v144, %v1002
    %1004 = vmatprep.mubr.f32.mxu0 %v1003
    %v1005 = vand.u32 %v112, 4294901760
    %v1006 = vsub.f32 %v112, %v1005
    %1007 = vmatmul.mubr.f32.gmra.mxu0 %v1006
    %v1008 = vpop.f32.mrf.mxu0
    %v1009 = vadd.f32 %v756, %v1008
    %v1010 = vpop.f32.mrf.mxu0
    %v1011 = vand.u32 %v145, 4294901760
    %v1012 = vsub.f32 %v145, %v1011
    %1013 = vmatprep.mubr.f32.mxu0 %v1012
    %v1014 = vand.u32 %v113, 4294901760
    %v1015 = vsub.f32 %v113, %v1014
    %1016 = vmatmul.mubr.f32.gmra.mxu0 %v1015
    %v1017 = vpop.f32.mrf.mxu0
    %v1018 = vadd.f32 %v763, %v1017
    %v1019 = vpop.f32.mrf.mxu0
    %v1020 = vand.u32 %v146, 4294901760
    %v1021 = vsub.f32 %v146, %v1020
    %1022 = vmatprep.mubr.f32.mxu0 %v1021
    %v1023 = vand.u32 %v114, 4294901760
    %v1024 = vsub.f32 %v114, %v1023
    %1025 = vmatmul.mubr.f32.gmra.mxu0 %v1024
    %v1026 = vpop.f32.mrf.mxu0
    %v1027 = vadd.f32 %v770, %v1026
    %v1028 = vpop.f32.mrf.mxu0
    %v1029 = vand.u32 %v147, 4294901760
    %v1030 = vsub.f32 %v147, %v1029
    %1031 = vmatprep.mubr.f32.mxu0 %v1030
    %v1032 = vand.u32 %v115, 4294901760
    %v1033 = vsub.f32 %v115, %v1032
    %1034 = vmatmul.mubr.f32.gmra.mxu0 %v1033
    %v1035 = vpop.f32.mrf.mxu0
    %v1036 = vadd.f32 %v777, %v1035
    %v1037 = vpop.f32.mrf.mxu0
    %v1038 = vand.u32 %v148, 4294901760
    %v1039 = vsub.f32 %v148, %v1038
    %1040 = vmatprep.mubr.f32.mxu0 %v1039
    %v1041 = vand.u32 %v116, 4294901760
    %v1042 = vsub.f32 %v116, %v1041
    %1043 = vmatmul.mubr.f32.gmra.mxu0 %v1042
    %v1044 = vpop.f32.mrf.mxu0
    %v1045 = vadd.f32 %v784, %v1044
    %v1046 = vpop.f32.mrf.mxu0
    %v1047 = vand.u32 %v149, 4294901760
    %v1048 = vsub.f32 %v149, %v1047
    %1049 = vmatprep.mubr.f32.mxu0 %v1048
    %v1050 = vand.u32 %v117, 4294901760
    %v1051 = vsub.f32 %v117, %v1050
    %1052 = vmatmul.mubr.f32.gmra.mxu0 %v1051
    %v1053 = vpop.f32.mrf.mxu0
    %v1054 = vadd.f32 %v791, %v1053
    %v1055 = vpop.f32.mrf.mxu0
    %v1056 = vand.u32 %v150, 4294901760
    %v1057 = vsub.f32 %v150, %v1056
    %1058 = vmatprep.mubr.f32.mxu0 %v1057
    %v1059 = vand.u32 %v118, 4294901760
    %v1060 = vsub.f32 %v118, %v1059
    %1061 = vmatmul.mubr.f32.gmra.mxu0 %v1060
    %v1062 = vpop.f32.mrf.mxu0
    %v1063 = vadd.f32 %v798, %v1062
    %v1064 = vpop.f32.mrf.mxu0
    %v1065 = vand.u32 %v151, 4294901760
    %v1066 = vsub.f32 %v151, %v1065
    %1067 = vmatprep.mubr.f32.mxu0 %v1066
    %v1068 = vand.u32 %v119, 4294901760
    %v1069 = vsub.f32 %v119, %v1068
    %1070 = vmatmul.mubr.f32.gmra.mxu0 %v1069
    %v1071 = vpop.f32.mrf.mxu0
    %v1072 = vadd.f32 %v805, %v1071
    %v1073 = vpop.f32.mrf.mxu0
    %v1074 = vand.u32 %v152, 4294901760
    %v1075 = vsub.f32 %v152, %v1074
    %1076 = vmatprep.mubr.f32.mxu0 %v1075
    %v1077 = vand.u32 %v120, 4294901760
    %v1078 = vsub.f32 %v120, %v1077
    %1079 = vmatmul.mubr.f32.gmra.mxu0 %v1078
    %v1080 = vpop.f32.mrf.mxu0
    %v1081 = vadd.f32 %v812, %v1080
    %v1082 = vpop.f32.mrf.mxu0
    %v1083 = vand.u32 %v153, 4294901760
    %v1084 = vsub.f32 %v153, %v1083
    %1085 = vmatprep.mubr.f32.mxu0 %v1084
    %v1086 = vand.u32 %v121, 4294901760
    %v1087 = vsub.f32 %v121, %v1086
    %1088 = vmatmul.mubr.f32.gmra.mxu0 %v1087
    %v1089 = vpop.f32.mrf.mxu0
    %v1090 = vadd.f32 %v819, %v1089
    %v1091 = vpop.f32.mrf.mxu0
    %v1092 = vand.u32 %v154, 4294901760
    %v1093 = vsub.f32 %v154, %v1092
    %1094 = vmatprep.mubr.f32.mxu0 %v1093
    %v1095 = vand.u32 %v122, 4294901760
    %v1096 = vsub.f32 %v122, %v1095
    %1097 = vmatmul.mubr.f32.gmra.mxu0 %v1096
    %v1098 = vpop.f32.mrf.mxu0
    %v1099 = vadd.f32 %v826, %v1098
    %v1100 = vpop.f32.mrf.mxu0
    %1101 = vdwg.mxu0
    %1102 = vmatprep.subr.mxu0 0.0
    %v1103 = vand.u32 %v58, 4294901760
    %1104 = vmatpush1.msra.mxu0 %v1103
    %1105 = vmatprep.subr.mxu0 0.0
    %v1106 = vand.u32 %v57, 4294901760
    %1107 = vmatpush1.msra.mxu0 %v1106
    %1108 = vmatprep.subr.mxu0 0.0
    %v1109 = vand.u32 %v56, 4294901760
    %1110 = vmatpush1.msra.mxu0 %v1109
    %1111 = vmatprep.subr.mxu0 0.0
    %v1112 = vand.u32 %v55, 4294901760
    %1113 = vmatpush1.msra.mxu0 %v1112
    %1114 = vmatprep.subr.mxu0 0.0
    %v1115 = vand.u32 %v54, 4294901760
    %1116 = vmatpush1.msra.mxu0 %v1115
    %1117 = vmatprep.subr.mxu0 0.0
    %v1118 = vand.u32 %v53, 4294901760
    %1119 = vmatpush1.msra.mxu0 %v1118
    %1120 = vmatprep.subr.mxu0 0.0
    %v1121 = vand.u32 %v52, 4294901760
    %1122 = vmatpush1.msra.mxu0 %v1121
    %1123 = vmatprep.subr.mxu0 0.0
    %v1124 = vand.u32 %v51, 4294901760
    %1125 = vmatpush1.msra.mxu0 %v1124
    %1126 = vmatprep.subr.mxu0 0.0
    %v1127 = vand.u32 %v50, 4294901760
    %1128 = vmatpush1.msra.mxu0 %v1127
    %1129 = vmatprep.subr.mxu0 0.0
    %v1130 = vand.u32 %v49, 4294901760
    %1131 = vmatpush1.msra.mxu0 %v1130
    %1132 = vmatprep.subr.mxu0 0.0
    %v1133 = vand.u32 %v48, 4294901760
    %1134 = vmatpush1.msra.mxu0 %v1133
    %1135 = vmatprep.subr.mxu0 0.0
    %v1136 = vand.u32 %v47, 4294901760
    %1137 = vmatpush1.msra.mxu0 %v1136
    %1138 = vmatprep.subr.mxu0 0.0
    %v1139 = vand.u32 %v46, 4294901760
    %1140 = vmatpush1.msra.mxu0 %v1139
    %1141 = vmatprep.subr.mxu0 0.0
    %v1142 = vand.u32 %v45, 4294901760
    %1143 = vmatpush1.msra.mxu0 %v1142
    %1144 = vmatprep.subr.mxu0 0.0
    %v1145 = vand.u32 %v44, 4294901760
    %1146 = vmatpush1.msra.mxu0 %v1145
    %1147 = vmatprep.subr.mxu0 0.0
    %v1148 = vand.u32 %v43, 4294901760
    %1149 = vmatpush1.msra.mxu0 %v1148
    %1150 = vmatprep.subr.mxu0 0.0
    %v1151 = vand.u32 %v74, 4294901760
    %1152 = vmatpush2.msra.mxu0 %v1151
    %1153 = vmatprep.subr.mxu0 0.0
    %v1154 = vand.u32 %v73, 4294901760
    %1155 = vmatpush2.msra.mxu0 %v1154
    %1156 = vmatprep.subr.mxu0 0.0
    %v1157 = vand.u32 %v72, 4294901760
    %1158 = vmatpush2.msra.mxu0 %v1157
    %1159 = vmatprep.subr.mxu0 0.0
    %v1160 = vand.u32 %v71, 4294901760
    %1161 = vmatpush2.msra.mxu0 %v1160
    %1162 = vmatprep.subr.mxu0 0.0
    %v1163 = vand.u32 %v70, 4294901760
    %1164 = vmatpush2.msra.mxu0 %v1163
    %1165 = vmatprep.subr.mxu0 0.0
    %v1166 = vand.u32 %v69, 4294901760
    %1167 = vmatpush2.msra.mxu0 %v1166
    %1168 = vmatprep.subr.mxu0 0.0
    %v1169 = vand.u32 %v68, 4294901760
    %1170 = vmatpush2.msra.mxu0 %v1169
    %1171 = vmatprep.subr.mxu0 0.0
    %v1172 = vand.u32 %v67, 4294901760
    %1173 = vmatpush2.msra.mxu0 %v1172
    %1174 = vmatprep.subr.mxu0 0.0
    %v1175 = vand.u32 %v66, 4294901760
    %1176 = vmatpush2.msra.mxu0 %v1175
    %1177 = vmatprep.subr.mxu0 0.0
    %v1178 = vand.u32 %v65, 4294901760
    %1179 = vmatpush2.msra.mxu0 %v1178
    %1180 = vmatprep.subr.mxu0 0.0
    %v1181 = vand.u32 %v64, 4294901760
    %1182 = vmatpush2.msra.mxu0 %v1181
    %1183 = vmatprep.subr.mxu0 0.0
    %v1184 = vand.u32 %v63, 4294901760
    %1185 = vmatpush2.msra.mxu0 %v1184
    %1186 = vmatprep.subr.mxu0 0.0
    %v1187 = vand.u32 %v62, 4294901760
    %1188 = vmatpush2.msra.mxu0 %v1187
    %1189 = vmatprep.subr.mxu0 0.0
    %v1190 = vand.u32 %v61, 4294901760
    %1191 = vmatpush2.msra.mxu0 %v1190
    %1192 = vmatprep.subr.mxu0 0.0
    %v1193 = vand.u32 %v60, 4294901760
    %1194 = vmatpush2.msra.mxu0 %v1193
    %1195 = vmatprep.subr.mxu0 0.0
    %v1196 = vand.u32 %v59, 4294901760
    %1197 = vmatpush2.msra.mxu0 %v1196
    %v1198 = vand.u32 %v139, 4294901760
    %v1199 = vsub.f32 %v139, %v1198
    %v1200 = vand.u32 %v1199, 4294901760
    %1201 = vmatprep.mubr.f32.mxu0 %v1200
    %v1202 = vand.u32 %v107, 4294901760
    %v1203 = vsub.f32 %v107, %v1202
    %v1204 = vand.u32 %v1203, 4294901760
    %1205 = vmatmul.mubr.f32.gmra.mxu0 %v1204
    %v1206 = vpop.f32.mrf.mxu0
    %v1207 = vadd.f32 %v964, %v1206
    %v1208 = vpop.f32.mrf.mxu0
    %v1209 = vand.u32 %v140, 4294901760
    %v1210 = vsub.f32 %v140, %v1209
    %v1211 = vand.u32 %v1210, 4294901760
    %1212 = vmatprep.mubr.f32.mxu0 %v1211
    %v1213 = vand.u32 %v108, 4294901760
    %v1214 = vsub.f32 %v108, %v1213
    %v1215 = vand.u32 %v1214, 4294901760
    %1216 = vmatmul.mubr.f32.gmra.mxu0 %v1215
    %v1217 = vpop.f32.mrf.mxu0
    %v1218 = vadd.f32 %v973, %v1217
    %v1219 = vpop.f32.mrf.mxu0
    %v1220 = vand.u32 %v141, 4294901760
    %v1221 = vsub.f32 %v141, %v1220
    %v1222 = vand.u32 %v1221, 4294901760
    %1223 = vmatprep.mubr.f32.mxu0 %v1222
    %v1224 = vand.u32 %v109, 4294901760
    %v1225 = vsub.f32 %v109, %v1224
    %v1226 = vand.u32 %v1225, 4294901760
    %1227 = vmatmul.mubr.f32.gmra.mxu0 %v1226
    %v1228 = vpop.f32.mrf.mxu0
    %v1229 = vadd.f32 %v982, %v1228
    %v1230 = vpop.f32.mrf.mxu0
    %v1231 = vand.u32 %v142, 4294901760
    %v1232 = vsub.f32 %v142, %v1231
    %v1233 = vand.u32 %v1232, 4294901760
    %1234 = vmatprep.mubr.f32.mxu0 %v1233
    %v1235 = vand.u32 %v110, 4294901760
    %v1236 = vsub.f32 %v110, %v1235
    %v1237 = vand.u32 %v1236, 4294901760
    %1238 = vmatmul.mubr.f32.gmra.mxu0 %v1237
    %v1239 = vpop.f32.mrf.mxu0
    %v1240 = vadd.f32 %v991, %v1239
    %v1241 = vpop.f32.mrf.mxu0
    %v1242 = vand.u32 %v143, 4294901760
    %v1243 = vsub.f32 %v143, %v1242
    %v1244 = vand.u32 %v1243, 4294901760
    %1245 = vmatprep.mubr.f32.mxu0 %v1244
    %v1246 = vand.u32 %v111, 4294901760
    %v1247 = vsub.f32 %v111, %v1246
    %v1248 = vand.u32 %v1247, 4294901760
    %1249 = vmatmul.mubr.f32.gmra.mxu0 %v1248
    %v1250 = vpop.f32.mrf.mxu0
    %v1251 = vadd.f32 %v1000, %v1250
    %v1252 = vpop.f32.mrf.mxu0
    %v1253 = vand.u32 %v144, 4294901760
    %v1254 = vsub.f32 %v144, %v1253
    %v1255 = vand.u32 %v1254, 4294901760
    %1256 = vmatprep.mubr.f32.mxu0 %v1255
    %v1257 = vand.u32 %v112, 4294901760
    %v1258 = vsub.f32 %v112, %v1257
    %v1259 = vand.u32 %v1258, 4294901760
    %1260 = vmatmul.mubr.f32.gmra.mxu0 %v1259
    %v1261 = vpop.f32.mrf.mxu0
    %v1262 = vadd.f32 %v1009, %v1261
    %v1263 = vpop.f32.mrf.mxu0
    %v1264 = vand.u32 %v145, 4294901760
    %v1265 = vsub.f32 %v145, %v1264
    %v1266 = vand.u32 %v1265, 4294901760
    %1267 = vmatprep.mubr.f32.mxu0 %v1266
    %v1268 = vand.u32 %v113, 4294901760
    %v1269 = vsub.f32 %v113, %v1268
    %v1270 = vand.u32 %v1269, 4294901760
    %1271 = vmatmul.mubr.f32.gmra.mxu0 %v1270
    %v1272 = vpop.f32.mrf.mxu0
    %v1273 = vadd.f32 %v1018, %v1272
    %v1274 = vpop.f32.mrf.mxu0
    %v1275 = vand.u32 %v146, 4294901760
    %v1276 = vsub.f32 %v146, %v1275
    %v1277 = vand.u32 %v1276, 4294901760
    %1278 = vmatprep.mubr.f32.mxu0 %v1277
    %v1279 = vand.u32 %v114, 4294901760
    %v1280 = vsub.f32 %v114, %v1279
    %v1281 = vand.u32 %v1280, 4294901760
    %1282 = vmatmul.mubr.f32.gmra.mxu0 %v1281
    %v1283 = vpop.f32.mrf.mxu0
    %v1284 = vadd.f32 %v1027, %v1283
    %v1285 = vpop.f32.mrf.mxu0
    %v1286 = vand.u32 %v147, 4294901760
    %v1287 = vsub.f32 %v147, %v1286
    %v1288 = vand.u32 %v1287, 4294901760
    %1289 = vmatprep.mubr.f32.mxu0 %v1288
    %v1290 = vand.u32 %v115, 4294901760
    %v1291 = vsub.f32 %v115, %v1290
    %v1292 = vand.u32 %v1291, 4294901760
    %1293 = vmatmul.mubr.f32.gmra.mxu0 %v1292
    %v1294 = vpop.f32.mrf.mxu0
    %v1295 = vadd.f32 %v1036, %v1294
    %v1296 = vpop.f32.mrf.mxu0
    %v1297 = vand.u32 %v148, 4294901760
    %v1298 = vsub.f32 %v148, %v1297
    %v1299 = vand.u32 %v1298, 4294901760
    %1300 = vmatprep.mubr.f32.mxu0 %v1299
    %v1301 = vand.u32 %v116, 4294901760
    %v1302 = vsub.f32 %v116, %v1301
    %v1303 = vand.u32 %v1302, 4294901760
    %1304 = vmatmul.mubr.f32.gmra.mxu0 %v1303
    %v1305 = vpop.f32.mrf.mxu0
    %v1306 = vadd.f32 %v1045, %v1305
    %v1307 = vpop.f32.mrf.mxu0
    %v1308 = vand.u32 %v149, 4294901760
    %v1309 = vsub.f32 %v149, %v1308
    %v1310 = vand.u32 %v1309, 4294901760
    %1311 = vmatprep.mubr.f32.mxu0 %v1310
    %v1312 = vand.u32 %v117, 4294901760
    %v1313 = vsub.f32 %v117, %v1312
    %v1314 = vand.u32 %v1313, 4294901760
    %1315 = vmatmul.mubr.f32.gmra.mxu0 %v1314
    %v1316 = vpop.f32.mrf.mxu0
    %v1317 = vadd.f32 %v1054, %v1316
    %v1318 = vpop.f32.mrf.mxu0
    %v1319 = vand.u32 %v150, 4294901760
    %v1320 = vsub.f32 %v150, %v1319
    %v1321 = vand.u32 %v1320, 4294901760
    %1322 = vmatprep.mubr.f32.mxu0 %v1321
    %v1323 = vand.u32 %v118, 4294901760
    %v1324 = vsub.f32 %v118, %v1323
    %v1325 = vand.u32 %v1324, 4294901760
    %1326 = vmatmul.mubr.f32.gmra.mxu0 %v1325
    %v1327 = vpop.f32.mrf.mxu0
    %v1328 = vadd.f32 %v1063, %v1327
    %v1329 = vpop.f32.mrf.mxu0
    %v1330 = vand.u32 %v151, 4294901760
    %v1331 = vsub.f32 %v151, %v1330
    %v1332 = vand.u32 %v1331, 4294901760
    %1333 = vmatprep.mubr.f32.mxu0 %v1332
    %v1334 = vand.u32 %v119, 4294901760
    %v1335 = vsub.f32 %v119, %v1334
    %v1336 = vand.u32 %v1335, 4294901760
    %1337 = vmatmul.mubr.f32.gmra.mxu0 %v1336
    %v1338 = vpop.f32.mrf.mxu0
    %v1339 = vadd.f32 %v1072, %v1338
    %v1340 = vpop.f32.mrf.mxu0
    %v1341 = vand.u32 %v152, 4294901760
    %v1342 = vsub.f32 %v152, %v1341
    %v1343 = vand.u32 %v1342, 4294901760
    %1344 = vmatprep.mubr.f32.mxu0 %v1343
    %v1345 = vand.u32 %v120, 4294901760
    %v1346 = vsub.f32 %v120, %v1345
    %v1347 = vand.u32 %v1346, 4294901760
    %1348 = vmatmul.mubr.f32.gmra.mxu0 %v1347
    %v1349 = vpop.f32.mrf.mxu0
    %v1350 = vadd.f32 %v1081, %v1349
    %v1351 = vpop.f32.mrf.mxu0
    %v1352 = vand.u32 %v153, 4294901760
    %v1353 = vsub.f32 %v153, %v1352
    %v1354 = vand.u32 %v1353, 4294901760
    %1355 = vmatprep.mubr.f32.mxu0 %v1354
    %v1356 = vand.u32 %v121, 4294901760
    %v1357 = vsub.f32 %v121, %v1356
    %v1358 = vand.u32 %v1357, 4294901760
    %1359 = vmatmul.mubr.f32.gmra.mxu0 %v1358
    %v1360 = vpop.f32.mrf.mxu0
    %v1361 = vadd.f32 %v1090, %v1360
    %v1362 = vpop.f32.mrf.mxu0
    %v1363 = vand.u32 %v154, 4294901760
    %v1364 = vsub.f32 %v154, %v1363
    %v1365 = vand.u32 %v1364, 4294901760
    %1366 = vmatprep.mubr.f32.mxu0 %v1365
    %v1367 = vand.u32 %v122, 4294901760
    %v1368 = vsub.f32 %v122, %v1367
    %v1369 = vand.u32 %v1368, 4294901760
    %1370 = vmatmul.mubr.f32.gmra.mxu0 %v1369
    %v1371 = vpop.f32.mrf.mxu0
    %v1372 = vadd.f32 %v1099, %v1371
    %v1373 = vpop.f32.mrf.mxu0
    %1374 = vdwg.mxu0
    %1375 = vmatprep.subr.mxu0 0.0
    %v1376 = vand.u32 %v58, 4294901760
    %v1377 = vsub.f32 %v58, %v1376
    %v1378 = vand.u32 %v1377, 4294901760
    %1379 = vmatpush1.msra.mxu0 %v1378
    %1380 = vmatprep.subr.mxu0 0.0
    %v1381 = vand.u32 %v57, 4294901760
    %v1382 = vsub.f32 %v57, %v1381
    %v1383 = vand.u32 %v1382, 4294901760
    %1384 = vmatpush1.msra.mxu0 %v1383
    %1385 = vmatprep.subr.mxu0 0.0
    %v1386 = vand.u32 %v56, 4294901760
    %v1387 = vsub.f32 %v56, %v1386
    %v1388 = vand.u32 %v1387, 4294901760
    %1389 = vmatpush1.msra.mxu0 %v1388
    %1390 = vmatprep.subr.mxu0 0.0
    %v1391 = vand.u32 %v55, 4294901760
    %v1392 = vsub.f32 %v55, %v1391
    %v1393 = vand.u32 %v1392, 4294901760
    %1394 = vmatpush1.msra.mxu0 %v1393
    %1395 = vmatprep.subr.mxu0 0.0
    %v1396 = vand.u32 %v54, 4294901760
    %v1397 = vsub.f32 %v54, %v1396
    %v1398 = vand.u32 %v1397, 4294901760
    %1399 = vmatpush1.msra.mxu0 %v1398
    %1400 = vmatprep.subr.mxu0 0.0
    %v1401 = vand.u32 %v53, 4294901760
    %v1402 = vsub.f32 %v53, %v1401
    %v1403 = vand.u32 %v1402, 4294901760
    %1404 = vmatpush1.msra.mxu0 %v1403
    %1405 = vmatprep.subr.mxu0 0.0
    %v1406 = vand.u32 %v52, 4294901760
    %v1407 = vsub.f32 %v52, %v1406
    %v1408 = vand.u32 %v1407, 4294901760
    %1409 = vmatpush1.msra.mxu0 %v1408
    %1410 = vmatprep.subr.mxu0 0.0
    %v1411 = vand.u32 %v51, 4294901760
    %v1412 = vsub.f32 %v51, %v1411
    %v1413 = vand.u32 %v1412, 4294901760
    %1414 = vmatpush1.msra.mxu0 %v1413
    %1415 = vmatprep.subr.mxu0 0.0
    %v1416 = vand.u32 %v50, 4294901760
    %v1417 = vsub.f32 %v50, %v1416
    %v1418 = vand.u32 %v1417, 4294901760
    %1419 = vmatpush1.msra.mxu0 %v1418
    %1420 = vmatprep.subr.mxu0 0.0
    %v1421 = vand.u32 %v49, 4294901760
    %v1422 = vsub.f32 %v49, %v1421
    %v1423 = vand.u32 %v1422, 4294901760
    %1424 = vmatpush1.msra.mxu0 %v1423
    %1425 = vmatprep.subr.mxu0 0.0
    %v1426 = vand.u32 %v48, 4294901760
    %v1427 = vsub.f32 %v48, %v1426
    %v1428 = vand.u32 %v1427, 4294901760
    %1429 = vmatpush1.msra.mxu0 %v1428
    %1430 = vmatprep.subr.mxu0 0.0
    %v1431 = vand.u32 %v47, 4294901760
    %v1432 = vsub.f32 %v47, %v1431
    %v1433 = vand.u32 %v1432, 4294901760
    %1434 = vmatpush1.msra.mxu0 %v1433
    %1435 = vmatprep.subr.mxu0 0.0
    %v1436 = vand.u32 %v46, 4294901760
    %v1437 = vsub.f32 %v46, %v1436
    %v1438 = vand.u32 %v1437, 4294901760
    %1439 = vmatpush1.msra.mxu0 %v1438
    %1440 = vmatprep.subr.mxu0 0.0
    %v1441 = vand.u32 %v45, 4294901760
    %v1442 = vsub.f32 %v45, %v1441
    %v1443 = vand.u32 %v1442, 4294901760
    %1444 = vmatpush1.msra.mxu0 %v1443
    %1445 = vmatprep.subr.mxu0 0.0
    %v1446 = vand.u32 %v44, 4294901760
    %v1447 = vsub.f32 %v44, %v1446
    %v1448 = vand.u32 %v1447, 4294901760
    %1449 = vmatpush1.msra.mxu0 %v1448
    %1450 = vmatprep.subr.mxu0 0.0
    %v1451 = vand.u32 %v43, 4294901760
    %v1452 = vsub.f32 %v43, %v1451
    %v1453 = vand.u32 %v1452, 4294901760
    %1454 = vmatpush1.msra.mxu0 %v1453
    %1455 = vmatprep.subr.mxu0 0.0
    %v1456 = vand.u32 %v74, 4294901760
    %v1457 = vsub.f32 %v74, %v1456
    %v1458 = vand.u32 %v1457, 4294901760
    %1459 = vmatpush2.msra.mxu0 %v1458
    %1460 = vmatprep.subr.mxu0 0.0
    %v1461 = vand.u32 %v73, 4294901760
    %v1462 = vsub.f32 %v73, %v1461
    %v1463 = vand.u32 %v1462, 4294901760
    %1464 = vmatpush2.msra.mxu0 %v1463
    %1465 = vmatprep.subr.mxu0 0.0
    %v1466 = vand.u32 %v72, 4294901760
    %v1467 = vsub.f32 %v72, %v1466
    %v1468 = vand.u32 %v1467, 4294901760
    %1469 = vmatpush2.msra.mxu0 %v1468
    %1470 = vmatprep.subr.mxu0 0.0
    %v1471 = vand.u32 %v71, 4294901760
    %v1472 = vsub.f32 %v71, %v1471
    %v1473 = vand.u32 %v1472, 4294901760
    %1474 = vmatpush2.msra.mxu0 %v1473
    %1475 = vmatprep.subr.mxu0 0.0
    %v1476 = vand.u32 %v70, 4294901760
    %v1477 = vsub.f32 %v70, %v1476
    %v1478 = vand.u32 %v1477, 4294901760
    %1479 = vmatpush2.msra.mxu0 %v1478
    %1480 = vmatprep.subr.mxu0 0.0
    %v1481 = vand.u32 %v69, 4294901760
    %v1482 = vsub.f32 %v69, %v1481
    %v1483 = vand.u32 %v1482, 4294901760
    %1484 = vmatpush2.msra.mxu0 %v1483
    %1485 = vmatprep.subr.mxu0 0.0
    %v1486 = vand.u32 %v68, 4294901760
    %v1487 = vsub.f32 %v68, %v1486
    %v1488 = vand.u32 %v1487, 4294901760
    %1489 = vmatpush2.msra.mxu0 %v1488
    %1490 = vmatprep.subr.mxu0 0.0
    %v1491 = vand.u32 %v67, 4294901760
    %v1492 = vsub.f32 %v67, %v1491
    %v1493 = vand.u32 %v1492, 4294901760
    %1494 = vmatpush2.msra.mxu0 %v1493
    %1495 = vmatprep.subr.mxu0 0.0
    %v1496 = vand.u32 %v66, 4294901760
    %v1497 = vsub.f32 %v66, %v1496
    %v1498 = vand.u32 %v1497, 4294901760
    %1499 = vmatpush2.msra.mxu0 %v1498
    %1500 = vmatprep.subr.mxu0 0.0
    %v1501 = vand.u32 %v65, 4294901760
    %v1502 = vsub.f32 %v65, %v1501
    %v1503 = vand.u32 %v1502, 4294901760
    %1504 = vmatpush2.msra.mxu0 %v1503
    %1505 = vmatprep.subr.mxu0 0.0
    %v1506 = vand.u32 %v64, 4294901760
    %v1507 = vsub.f32 %v64, %v1506
    %v1508 = vand.u32 %v1507, 4294901760
    %1509 = vmatpush2.msra.mxu0 %v1508
    %1510 = vmatprep.subr.mxu0 0.0
    %v1511 = vand.u32 %v63, 4294901760
    %v1512 = vsub.f32 %v63, %v1511
    %v1513 = vand.u32 %v1512, 4294901760
    %1514 = vmatpush2.msra.mxu0 %v1513
    %1515 = vmatprep.subr.mxu0 0.0
    %v1516 = vand.u32 %v62, 4294901760
    %v1517 = vsub.f32 %v62, %v1516
    %v1518 = vand.u32 %v1517, 4294901760
    %1519 = vmatpush2.msra.mxu0 %v1518
    %1520 = vmatprep.subr.mxu0 0.0
    %v1521 = vand.u32 %v61, 4294901760
    %v1522 = vsub.f32 %v61, %v1521
    %v1523 = vand.u32 %v1522, 4294901760
    %1524 = vmatpush2.msra.mxu0 %v1523
    %1525 = vmatprep.subr.mxu0 0.0
    %v1526 = vand.u32 %v60, 4294901760
    %v1527 = vsub.f32 %v60, %v1526
    %v1528 = vand.u32 %v1527, 4294901760
    %1529 = vmatpush2.msra.mxu0 %v1528
    %1530 = vmatprep.subr.mxu0 0.0
    %v1531 = vand.u32 %v59, 4294901760
    %v1532 = vsub.f32 %v59, %v1531
    %v1533 = vand.u32 %v1532, 4294901760
    %1534 = vmatpush2.msra.mxu0 %v1533
    %v1535 = vand.u32 %v139, 4294901760
    %1536 = vmatprep.mubr.f32.mxu0 %v1535
    %v1537 = vand.u32 %v107, 4294901760
    %1538 = vmatmul.mubr.f32.gmra.mxu0 %v1537
    %v1539 = vpop.f32.mrf.mxu0
    %v1540 = vadd.f32 %v1207, %v1539
    %v1541 = vpop.f32.mrf.mxu0
    %v1542 = vand.u32 %v140, 4294901760
    %1543 = vmatprep.mubr.f32.mxu0 %v1542
    %v1544 = vand.u32 %v108, 4294901760
    %1545 = vmatmul.mubr.f32.gmra.mxu0 %v1544
    %v1546 = vpop.f32.mrf.mxu0
    %v1547 = vadd.f32 %v1218, %v1546
    %v1548 = vpop.f32.mrf.mxu0
    %v1549 = vand.u32 %v141, 4294901760
    %1550 = vmatprep.mubr.f32.mxu0 %v1549
    %v1551 = vand.u32 %v109, 4294901760
    %1552 = vmatmul.mubr.f32.gmra.mxu0 %v1551
    %v1553 = vpop.f32.mrf.mxu0
    %v1554 = vadd.f32 %v1229, %v1553
    %v1555 = vpop.f32.mrf.mxu0
    %v1556 = vand.u32 %v142, 4294901760
    %1557 = vmatprep.mubr.f32.mxu0 %v1556
    %v1558 = vand.u32 %v110, 4294901760
    %1559 = vmatmul.mubr.f32.gmra.mxu0 %v1558
    %v1560 = vpop.f32.mrf.mxu0
    %v1561 = vadd.f32 %v1240, %v1560
    %v1562 = vpop.f32.mrf.mxu0
    %v1563 = vand.u32 %v143, 4294901760
    %1564 = vmatprep.mubr.f32.mxu0 %v1563
    %v1565 = vand.u32 %v111, 4294901760
    %1566 = vmatmul.mubr.f32.gmra.mxu0 %v1565
    %v1567 = vpop.f32.mrf.mxu0
    %v1568 = vadd.f32 %v1251, %v1567
    %v1569 = vpop.f32.mrf.mxu0
    %v1570 = vand.u32 %v144, 4294901760
    %1571 = vmatprep.mubr.f32.mxu0 %v1570
    %v1572 = vand.u32 %v112, 4294901760
    %1573 = vmatmul.mubr.f32.gmra.mxu0 %v1572
    %v1574 = vpop.f32.mrf.mxu0
    %v1575 = vadd.f32 %v1262, %v1574
    %v1576 = vpop.f32.mrf.mxu0
    %v1577 = vand.u32 %v145, 4294901760
    %1578 = vmatprep.mubr.f32.mxu0 %v1577
    %v1579 = vand.u32 %v113, 4294901760
    %1580 = vmatmul.mubr.f32.gmra.mxu0 %v1579
    %v1581 = vpop.f32.mrf.mxu0
    %v1582 = vadd.f32 %v1273, %v1581
    %v1583 = vpop.f32.mrf.mxu0
    %v1584 = vand.u32 %v146, 4294901760
    %1585 = vmatprep.mubr.f32.mxu0 %v1584
    %v1586 = vand.u32 %v114, 4294901760
    %1587 = vmatmul.mubr.f32.gmra.mxu0 %v1586
    %v1588 = vpop.f32.mrf.mxu0
    %v1589 = vadd.f32 %v1284, %v1588
    %v1590 = vpop.f32.mrf.mxu0
    %v1591 = vand.u32 %v147, 4294901760
    %1592 = vmatprep.mubr.f32.mxu0 %v1591
    %v1593 = vand.u32 %v115, 4294901760
    %1594 = vmatmul.mubr.f32.gmra.mxu0 %v1593
    %v1595 = vpop.f32.mrf.mxu0
    %v1596 = vadd.f32 %v1295, %v1595
    %v1597 = vpop.f32.mrf.mxu0
    %v1598 = vand.u32 %v148, 4294901760
    %1599 = vmatprep.mubr.f32.mxu0 %v1598
    %v1600 = vand.u32 %v116, 4294901760
    %1601 = vmatmul.mubr.f32.gmra.mxu0 %v1600
    %v1602 = vpop.f32.mrf.mxu0
    %v1603 = vadd.f32 %v1306, %v1602
    %v1604 = vpop.f32.mrf.mxu0
    %v1605 = vand.u32 %v149, 4294901760
    %1606 = vmatprep.mubr.f32.mxu0 %v1605
    %v1607 = vand.u32 %v117, 4294901760
    %1608 = vmatmul.mubr.f32.gmra.mxu0 %v1607
    %v1609 = vpop.f32.mrf.mxu0
    %v1610 = vadd.f32 %v1317, %v1609
    %v1611 = vpop.f32.mrf.mxu0
    %v1612 = vand.u32 %v150, 4294901760
    %1613 = vmatprep.mubr.f32.mxu0 %v1612
    %v1614 = vand.u32 %v118, 4294901760
    %1615 = vmatmul.mubr.f32.gmra.mxu0 %v1614
    %v1616 = vpop.f32.mrf.mxu0
    %v1617 = vadd.f32 %v1328, %v1616
    %v1618 = vpop.f32.mrf.mxu0
    %v1619 = vand.u32 %v151, 4294901760
    %1620 = vmatprep.mubr.f32.mxu0 %v1619
    %v1621 = vand.u32 %v119, 4294901760
    %1622 = vmatmul.mubr.f32.gmra.mxu0 %v1621
    %v1623 = vpop.f32.mrf.mxu0
    %v1624 = vadd.f32 %v1339, %v1623
    %v1625 = vpop.f32.mrf.mxu0
    %v1626 = vand.u32 %v152, 4294901760
    %1627 = vmatprep.mubr.f32.mxu0 %v1626
    %v1628 = vand.u32 %v120, 4294901760
    %1629 = vmatmul.mubr.f32.gmra.mxu0 %v1628
    %v1630 = vpop.f32.mrf.mxu0
    %v1631 = vadd.f32 %v1350, %v1630
    %v1632 = vpop.f32.mrf.mxu0
    %v1633 = vand.u32 %v153, 4294901760
    %1634 = vmatprep.mubr.f32.mxu0 %v1633
    %v1635 = vand.u32 %v121, 4294901760
    %1636 = vmatmul.mubr.f32.gmra.mxu0 %v1635
    %v1637 = vpop.f32.mrf.mxu0
    %v1638 = vadd.f32 %v1361, %v1637
    %v1639 = vpop.f32.mrf.mxu0
    %v1640 = vand.u32 %v154, 4294901760
    %1641 = vmatprep.mubr.f32.mxu0 %v1640
    %v1642 = vand.u32 %v122, 4294901760
    %1643 = vmatmul.mubr.f32.gmra.mxu0 %v1642
    %v1644 = vpop.f32.mrf.mxu0
    %v1645 = vadd.f32 %v1372, %v1644
    %v1646 = vpop.f32.mrf.mxu0
    %1647 = vdwg.mxu0
    %1648 = vmatprep.subr.mxu0 0.0
    %v1649 = vand.u32 %v58, 4294901760
    %1650 = vmatpush1.msra.mxu0 %v1649
    %1651 = vmatprep.subr.mxu0 0.0
    %v1652 = vand.u32 %v57, 4294901760
    %1653 = vmatpush1.msra.mxu0 %v1652
    %1654 = vmatprep.subr.mxu0 0.0
    %v1655 = vand.u32 %v56, 4294901760
    %1656 = vmatpush1.msra.mxu0 %v1655
    %1657 = vmatprep.subr.mxu0 0.0
    %v1658 = vand.u32 %v55, 4294901760
    %1659 = vmatpush1.msra.mxu0 %v1658
    %1660 = vmatprep.subr.mxu0 0.0
    %v1661 = vand.u32 %v54, 4294901760
    %1662 = vmatpush1.msra.mxu0 %v1661
    %1663 = vmatprep.subr.mxu0 0.0
    %v1664 = vand.u32 %v53, 4294901760
    %1665 = vmatpush1.msra.mxu0 %v1664
    %1666 = vmatprep.subr.mxu0 0.0
    %v1667 = vand.u32 %v52, 4294901760
    %1668 = vmatpush1.msra.mxu0 %v1667
    %1669 = vmatprep.subr.mxu0 0.0
    %v1670 = vand.u32 %v51, 4294901760
    %1671 = vmatpush1.msra.mxu0 %v1670
    %1672 = vmatprep.subr.mxu0 0.0
    %v1673 = vand.u32 %v50, 4294901760
    %1674 = vmatpush1.msra.mxu0 %v1673
    %1675 = vmatprep.subr.mxu0 0.0
    %v1676 = vand.u32 %v49, 4294901760
    %1677 = vmatpush1.msra.mxu0 %v1676
    %1678 = vmatprep.subr.mxu0 0.0
    %v1679 = vand.u32 %v48, 4294901760
    %1680 = vmatpush1.msra.mxu0 %v1679
    %1681 = vmatprep.subr.mxu0 0.0
    %v1682 = vand.u32 %v47, 4294901760
    %1683 = vmatpush1.msra.mxu0 %v1682
    %1684 = vmatprep.subr.mxu0 0.0
    %v1685 = vand.u32 %v46, 4294901760
    %1686 = vmatpush1.msra.mxu0 %v1685
    %1687 = vmatprep.subr.mxu0 0.0
    %v1688 = vand.u32 %v45, 4294901760
    %1689 = vmatpush1.msra.mxu0 %v1688
    %1690 = vmatprep.subr.mxu0 0.0
    %v1691 = vand.u32 %v44, 4294901760
    %1692 = vmatpush1.msra.mxu0 %v1691
    %1693 = vmatprep.subr.mxu0 0.0
    %v1694 = vand.u32 %v43, 4294901760
    %1695 = vmatpush1.msra.mxu0 %v1694
    %1696 = vmatprep.subr.mxu0 0.0
    %v1697 = vand.u32 %v74, 4294901760
    %1698 = vmatpush2.msra.mxu0 %v1697
    %1699 = vmatprep.subr.mxu0 0.0
    %v1700 = vand.u32 %v73, 4294901760
    %1701 = vmatpush2.msra.mxu0 %v1700
    %1702 = vmatprep.subr.mxu0 0.0
    %v1703 = vand.u32 %v72, 4294901760
    %1704 = vmatpush2.msra.mxu0 %v1703
    %1705 = vmatprep.subr.mxu0 0.0
    %v1706 = vand.u32 %v71, 4294901760
    %1707 = vmatpush2.msra.mxu0 %v1706
    %1708 = vmatprep.subr.mxu0 0.0
    %v1709 = vand.u32 %v70, 4294901760
    %1710 = vmatpush2.msra.mxu0 %v1709
    %1711 = vmatprep.subr.mxu0 0.0
    %v1712 = vand.u32 %v69, 4294901760
    %1713 = vmatpush2.msra.mxu0 %v1712
    %1714 = vmatprep.subr.mxu0 0.0
    %v1715 = vand.u32 %v68, 4294901760
    %1716 = vmatpush2.msra.mxu0 %v1715
    %1717 = vmatprep.subr.mxu0 0.0
    %v1718 = vand.u32 %v67, 4294901760
    %1719 = vmatpush2.msra.mxu0 %v1718
    %1720 = vmatprep.subr.mxu0 0.0
    %v1721 = vand.u32 %v66, 4294901760
    %1722 = vmatpush2.msra.mxu0 %v1721
    %1723 = vmatprep.subr.mxu0 0.0
    %v1724 = vand.u32 %v65, 4294901760
    %1725 = vmatpush2.msra.mxu0 %v1724
    %1726 = vmatprep.subr.mxu0 0.0
    %v1727 = vand.u32 %v64, 4294901760
    %1728 = vmatpush2.msra.mxu0 %v1727
    %1729 = vmatprep.subr.mxu0 0.0
    %v1730 = vand.u32 %v63, 4294901760
    %1731 = vmatpush2.msra.mxu0 %v1730
    %1732 = vmatprep.subr.mxu0 0.0
    %v1733 = vand.u32 %v62, 4294901760
    %1734 = vmatpush2.msra.mxu0 %v1733
    %1735 = vmatprep.subr.mxu0 0.0
    %v1736 = vand.u32 %v61, 4294901760
    %1737 = vmatpush2.msra.mxu0 %v1736
    %1738 = vmatprep.subr.mxu0 0.0
    %v1739 = vand.u32 %v60, 4294901760
    %1740 = vmatpush2.msra.mxu0 %v1739
    %1741 = vmatprep.subr.mxu0 0.0
    %v1742 = vand.u32 %v59, 4294901760
    %1743 = vmatpush2.msra.mxu0 %v1742
    %v1744 = vand.u32 %v139, 4294901760
    %1745 = vmatprep.mubr.f32.mxu0 %v1744
    %v1746 = vand.u32 %v107, 4294901760
    %1747 = vmatmul.mubr.f32.gmra.mxu0 %v1746
    %v1748 = vpop.f32.mrf.mxu0
    %v1749 = vadd.f32 %v1540, %v1748
    %v1750 = vpop.f32.mrf.mxu0
    %v1751 = vand.u32 %v140, 4294901760
    %1752 = vmatprep.mubr.f32.mxu0 %v1751
    %v1753 = vand.u32 %v108, 4294901760
    %1754 = vmatmul.mubr.f32.gmra.mxu0 %v1753
    %v1755 = vpop.f32.mrf.mxu0
    %v1756 = vadd.f32 %v1547, %v1755
    %v1757 = vpop.f32.mrf.mxu0
    %v1758 = vand.u32 %v141, 4294901760
    %1759 = vmatprep.mubr.f32.mxu0 %v1758
    %v1760 = vand.u32 %v109, 4294901760
    %1761 = vmatmul.mubr.f32.gmra.mxu0 %v1760
    %v1762 = vpop.f32.mrf.mxu0
    %v1763 = vadd.f32 %v1554, %v1762
    %v1764 = vpop.f32.mrf.mxu0
    %v1765 = vand.u32 %v142, 4294901760
    %1766 = vmatprep.mubr.f32.mxu0 %v1765
    %v1767 = vand.u32 %v110, 4294901760
    %1768 = vmatmul.mubr.f32.gmra.mxu0 %v1767
    %v1769 = vpop.f32.mrf.mxu0
    %v1770 = vadd.f32 %v1561, %v1769
    %v1771 = vpop.f32.mrf.mxu0
    %v1772 = vand.u32 %v143, 4294901760
    %1773 = vmatprep.mubr.f32.mxu0 %v1772
    %v1774 = vand.u32 %v111, 4294901760
    %1775 = vmatmul.mubr.f32.gmra.mxu0 %v1774
    %v1776 = vpop.f32.mrf.mxu0
    %v1777 = vadd.f32 %v1568, %v1776
    %v1778 = vpop.f32.mrf.mxu0
    %v1779 = vand.u32 %v144, 4294901760
    %1780 = vmatprep.mubr.f32.mxu0 %v1779
    %v1781 = vand.u32 %v112, 4294901760
    %1782 = vmatmul.mubr.f32.gmra.mxu0 %v1781
    %v1783 = vpop.f32.mrf.mxu0
    %v1784 = vadd.f32 %v1575, %v1783
    %v1785 = vpop.f32.mrf.mxu0
    %v1786 = vand.u32 %v145, 4294901760
    %1787 = vmatprep.mubr.f32.mxu0 %v1786
    %v1788 = vand.u32 %v113, 4294901760
    %1789 = vmatmul.mubr.f32.gmra.mxu0 %v1788
    %v1790 = vpop.f32.mrf.mxu0
    %v1791 = vadd.f32 %v1582, %v1790
    %v1792 = vpop.f32.mrf.mxu0
    %v1793 = vand.u32 %v146, 4294901760
    %1794 = vmatprep.mubr.f32.mxu0 %v1793
    %v1795 = vand.u32 %v114, 4294901760
    %1796 = vmatmul.mubr.f32.gmra.mxu0 %v1795
    %v1797 = vpop.f32.mrf.mxu0
    %v1798 = vadd.f32 %v1589, %v1797
    %v1799 = vpop.f32.mrf.mxu0
    %v1800 = vand.u32 %v147, 4294901760
    %1801 = vmatprep.mubr.f32.mxu0 %v1800
    %v1802 = vand.u32 %v115, 4294901760
    %1803 = vmatmul.mubr.f32.gmra.mxu0 %v1802
    %v1804 = vpop.f32.mrf.mxu0
    %v1805 = vadd.f32 %v1596, %v1804
    %v1806 = vpop.f32.mrf.mxu0
    %v1807 = vand.u32 %v148, 4294901760
    %1808 = vmatprep.mubr.f32.mxu0 %v1807
    %v1809 = vand.u32 %v116, 4294901760
    %1810 = vmatmul.mubr.f32.gmra.mxu0 %v1809
    %v1811 = vpop.f32.mrf.mxu0
    %v1812 = vadd.f32 %v1603, %v1811
    %v1813 = vpop.f32.mrf.mxu0
    %v1814 = vand.u32 %v149, 4294901760
    %1815 = vmatprep.mubr.f32.mxu0 %v1814
    %v1816 = vand.u32 %v117, 4294901760
    %1817 = vmatmul.mubr.f32.gmra.mxu0 %v1816
    %v1818 = vpop.f32.mrf.mxu0
    %v1819 = vadd.f32 %v1610, %v1818
    %v1820 = vpop.f32.mrf.mxu0
    %v1821 = vand.u32 %v150, 4294901760
    %1822 = vmatprep.mubr.f32.mxu0 %v1821
    %v1823 = vand.u32 %v118, 4294901760
    %1824 = vmatmul.mubr.f32.gmra.mxu0 %v1823
    %v1825 = vpop.f32.mrf.mxu0
    %v1826 = vadd.f32 %v1617, %v1825
    %v1827 = vpop.f32.mrf.mxu0
    %v1828 = vand.u32 %v151, 4294901760
    %1829 = vmatprep.mubr.f32.mxu0 %v1828
    %v1830 = vand.u32 %v119, 4294901760
    %1831 = vmatmul.mubr.f32.gmra.mxu0 %v1830
    %v1832 = vpop.f32.mrf.mxu0
    %v1833 = vadd.f32 %v1624, %v1832
    %v1834 = vpop.f32.mrf.mxu0
    %v1835 = vand.u32 %v152, 4294901760
    %1836 = vmatprep.mubr.f32.mxu0 %v1835
    %v1837 = vand.u32 %v120, 4294901760
    %1838 = vmatmul.mubr.f32.gmra.mxu0 %v1837
    %v1839 = vpop.f32.mrf.mxu0
    %v1840 = vadd.f32 %v1631, %v1839
    %v1841 = vpop.f32.mrf.mxu0
    %v1842 = vand.u32 %v153, 4294901760
    %1843 = vmatprep.mubr.f32.mxu0 %v1842
    %v1844 = vand.u32 %v121, 4294901760
    %1845 = vmatmul.mubr.f32.gmra.mxu0 %v1844
    %v1846 = vpop.f32.mrf.mxu0
    %v1847 = vadd.f32 %v1638, %v1846
    %v1848 = vpop.f32.mrf.mxu0
    %v1849 = vand.u32 %v154, 4294901760
    %1850 = vmatprep.mubr.f32.mxu0 %v1849
    %v1851 = vand.u32 %v122, 4294901760
    %1852 = vmatmul.mubr.f32.gmra.mxu0 %v1851
    %v1853 = vpop.f32.mrf.mxu0
    %v1854 = vadd.f32 %v1645, %v1853
    %v1855 = vpop.f32.mrf.mxu0
    %1856 = vdwg.mxu0
    %v1857 = vadd.f32 %v75, %v1749
    %v1858 = vadd.f32 %v76, %v1756
    %v1859 = vadd.f32 %v77, %v1763
    %v1860 = vadd.f32 %v78, %v1770
    %v1861 = vadd.f32 %v79, %v1777
    %v1862 = vadd.f32 %v80, %v1784
    %v1863 = vadd.f32 %v81, %v1791
    %v1864 = vadd.f32 %v82, %v1798
    %v1865 = vadd.f32 %v83, %v1805
    %v1866 = vadd.f32 %v84, %v1812
    %v1867 = vadd.f32 %v85, %v1819
    %v1868 = vadd.f32 %v86, %v1826
    %v1869 = vadd.f32 %v87, %v1833
    %v1870 = vadd.f32 %v88, %v1840
    %v1871 = vadd.f32 %v89, %v1847
    %v1872 = vadd.f32 %v90, %v1854
    %1873 = vst [vmem:[#allocation2] sm:$0xff] %v1857
    %1874 = vst [vmem:[#allocation2 + $0x8] sm:$0xff] %v1858
    %1875 = vst [vmem:[#allocation2 + $0x10] sm:$0xff] %v1859
    %1876 = vst [vmem:[#allocation2 + $0x18] sm:$0xff] %v1860
    %1877 = vst [vmem:[#allocation2 + $0x20] sm:$0xff] %v1861
    %1878 = vst [vmem:[#allocation2 + $0x28] sm:$0xff] %v1862
    %1879 = vst [vmem:[#allocation2 + $0x30] sm:$0xff] %v1863
    %1880 = vst [vmem:[#allocation2 + $0x38] sm:$0xff] %v1864
    %1881 = vst [vmem:[#allocation2 + $0x40] sm:$0xff] %v1865
    %1882 = vst [vmem:[#allocation2 + $0x48] sm:$0xff] %v1866
    %1883 = vst [vmem:[#allocation2 + $0x50] sm:$0xff] %v1867
    %1884 = vst [vmem:[#allocation2 + $0x58] sm:$0xff] %v1868
    %1885 = vst [vmem:[#allocation2 + $0x60] sm:$0xff] %v1869
    %1886 = vst [vmem:[#allocation2 + $0x68] sm:$0xff] %v1870
    %1887 = vst [vmem:[#allocation2 + $0x70] sm:$0xff] %v1871
    %1888 = vst [vmem:[#allocation2 + $0x78] sm:$0xff] %v1872
    // Predicated region
    $region14: #{tpu_custom_call.1} parent=1 // pred_check
      %p1889 = pneg %p23
    $region15: #{tpu_custom_call.1} parent=1 // pred_check_branch
      %1891 = sbr.rel (%p1889) target = $region17
    $region16: #{tpu_custom_call.1} parent=1 // pred_region
      %v1892 = vld [vmem:[#allocation2] sm:$0xff]
      %v1893 = vld [vmem:[#allocation2 + $0x8] sm:$0xff]
      %v1894 = vld [vmem:[#allocation2 + $0x10] sm:$0xff]
      %v1895 = vld [vmem:[#allocation2 + $0x18] sm:$0xff]
      %v1896 = vld [vmem:[#allocation2 + $0x20] sm:$0xff]
      %v1897 = vld [vmem:[#allocation2 + $0x28] sm:$0xff]
      %v1898 = vld [vmem:[#allocation2 + $0x30] sm:$0xff]
      %v1899 = vld [vmem:[#allocation2 + $0x38] sm:$0xff]
      %v1900 = vld [vmem:[#allocation2 + $0x40] sm:$0xff]
      %v1901 = vld [vmem:[#allocation2 + $0x48] sm:$0xff]
      %v1902 = vld [vmem:[#allocation2 + $0x50] sm:$0xff]
      %v1903 = vld [vmem:[#allocation2 + $0x58] sm:$0xff]
      %v1904 = vld [vmem:[#allocation2 + $0x60] sm:$0xff]
      %v1905 = vld [vmem:[#allocation2 + $0x68] sm:$0xff]
      %v1906 = vld [vmem:[#allocation2 + $0x70] sm:$0xff]
      %v1907 = vld [vmem:[#allocation2 + $0x78] sm:$0xff]
      %1908 = vst [vmem:[#allocation6] sm:$0xff] %v1892
      %1909 = vst [vmem:[#allocation6 + $0x8] sm:$0xff] %v1893
      %1910 = vst [vmem:[#allocation6 + $0x10] sm:$0xff] %v1894
      %1911 = vst [vmem:[#allocation6 + $0x18] sm:$0xff] %v1895
      %1912 = vst [vmem:[#allocation6 + $0x20] sm:$0xff] %v1896
      %1913 = vst [vmem:[#allocation6 + $0x28] sm:$0xff] %v1897
      %1914 = vst [vmem:[#allocation6 + $0x30] sm:$0xff] %v1898
      %1915 = vst [vmem:[#allocation6 + $0x38] sm:$0xff] %v1899
      %1916 = vst [vmem:[#allocation6 + $0x40] sm:$0xff] %v1900
      %1917 = vst [vmem:[#allocation6 + $0x48] sm:$0xff] %v1901
      %1918 = vst [vmem:[#allocation6 + $0x50] sm:$0xff] %v1902
      %1919 = vst [vmem:[#allocation6 + $0x58] sm:$0xff] %v1903
      %1920 = vst [vmem:[#allocation6 + $0x60] sm:$0xff] %v1904
      %1921 = vst [vmem:[#allocation6 + $0x68] sm:$0xff] %v1905
      %1922 = vst [vmem:[#allocation6 + $0x70] sm:$0xff] %v1906
      %1923 = vst [vmem:[#allocation6 + $0x78] sm:$0xff] %v1907
    $region17: #{tpu_custom_call.1} parent=1 // pred_fallthru
      _
    // Predicated region
    $region18: #{tpu_custom_call.1} parent=1 // pred_check
      _
    $region19: #{tpu_custom_call.1} parent=1 // pred_check_branch
      %1925 = sbr.rel (0) target = $region21
    $region20: #{tpu_custom_call.1} parent=1 // pred_region
      %s1927 = ssub.s32 2048, 2048
      %1928 = vsyncadd [#allocation5], %s1927
      %s1929 = sshll.u32 [#allocation6], 4
      %s1930 = int_to_ptr.vmem [resolvable:$true] %s1929
      %1935 = dma.vmem_to_hbm [thread:$0]  %s1930, 2048, %s1, [#allocation5], 128, 128, 8
    $region21: #{tpu_custom_call.1} parent=1 // pred_fallthru
      _
    // Predicated region
    $region22: #{tpu_custom_call.1} parent=1 // pred_check
      _
    $region23: #{tpu_custom_call.1} parent=1 // pred_check_branch
      %1937 = sbr.rel (0) target = $region25
    $region24: #{tpu_custom_call.1} parent=1 // pred_region
      %1938 = dma.done [#allocation5], 2048
    $region25: #{tpu_custom_call.1} parent=1 // pred_fallthru
      _
    %1939 = vsyncpa [#allocation4], 1
    %1940 = vsyncpa [#allocation5], 1

</llo_original>
